<compile_context>
chip_gen: v6e
topology: v6e:2x2x1
jax: 0.10.0
libtpu: 0.0.40
codegen_flags: <defaults>
</compile_context>

<pallas_src>
import functools

import jax
import jax.numpy as jnp
from jax.experimental import pallas as pl
from jax.experimental.pallas import tpu as pltpu


# PyTorch-style "x @ W^T" contraction for 2-D operands (same dimension numbers
# the official Pallas flash-attention kernels use for q @ k^T).
_TRANS_B = (((1,), (1,)), ((), ()))


# ----------------------------------------------------------------------------
# Fused bidirectional LSTM kernel (single grid-less invocation).
# Gate order follows PyTorch: [i, f, g, o] along the 4H axis.  Rows [:B] of
# every stacked (2B, ...) tensor are the forward direction, rows [B:] the
# backward direction (its time axis is handled by indexing L-1-s).
# ----------------------------------------------------------------------------
def _encoder_kernel(emb_ref, wihf_ref, wihb_ref,
                    bihf_ref, bhhf_ref, bihb_ref, bhhb_ref,
                    whhf_ref, whhb_ref, h0_ref, c0_ref,
                    out_ref, hn_ref, cn_ref,
                    gx_sc, whh_sc, hseq_sc):
    L, B, H = out_ref.shape
    B2, G4 = 2 * B, 4 * H
    f32 = jnp.float32

    # ---- Hoisted input projection: 2 MXU matmuls for ALL timesteps and both
    # directions, biases folded, parked in the stacked per-step layout the
    # recurrence consumes (one clean (2B, 4H) load per step).
    emb = emb_ref[...]                                              # (L*B, D)
    gxf = jax.lax.dot_general(emb, wihf_ref[...], _TRANS_B,
                              preferred_element_type=f32)
    gxf = gxf + bihf_ref[...] + bhhf_ref[...]                       # (L*B, 4H)
    gxb = jax.lax.dot_general(emb, wihb_ref[...], _TRANS_B,
                              preferred_element_type=f32)
    gxb = gxb + bihb_ref[...] + bhhb_ref[...]
    for s in range(L):                       # static, off the serial path
        gx_sc[s, 0:B, :] = gxf[s * B:(s + 1) * B, :]
        gx_sc[s, B:B2, :] = gxb[(L - 1 - s) * B:(L - s) * B, :]

    # ---- Stacked recurrent weight [W_hh_f; W_hh_b] assembled once, then held
    # as a value (vreg-resident) across the whole unrolled recurrence.
    # TODO(synk): pltpu.matmul_push_rhs/acc_lhs could keep it staged inside the
    # MXU itself, but that explicit-MXU path is generation-specific; skipped.
    whh_sc[0:G4, :] = whhf_ref[...]
    whh_sc[G4:2 * G4, :] = whhb_ref[...]
    whh = whh_sc[...]                                               # (8H, H)

    # Hoisted row mask: rows < B belong to the forward direction.
    fwd_rows = jax.lax.broadcasted_iota(jnp.int32, (B2, G4), 0) < B

    h = h0_ref[...]                                                 # (2B, H)
    c = c0_ref[...]

    # ---- Serial recurrence, fully unrolled (L small & static).
    for s in range(L):
        gx_s = gx_sc[s]                                             # (2B, 4H)
        # One MXU call per step for both directions' recurrent projection.
        hh = jax.lax.dot_general(h, whh, _TRANS_B,
                                 preferred_element_type=f32)        # (2B, 8H)
        # 128-lane-aligned halves; the row mask picks the right direction.
        gates = gx_s + jnp.where(fwd_rows, hh[:, :G4], hh[:, G4:])

        sg = jax.nn.sigmoid(gates)                  # whole-tile EUP sigmoid
        i_g = sg[:, 0 * H:1 * H]
        f_g = sg[:, 1 * H:2 * H]
        o_g = sg[:, 3 * H:4 * H]
        g_g = jnp.tanh(gates[:, 2 * H:3 * H])

        c = f_g * c + i_g * g_g
        h = o_g * jnp.tanh(c)

        # Single full-sublane (2B, H) store per step (was 2 masked stores).
        hseq_sc[s] = h

    # ---- Epilogue (off the serial path): bidirectional combine, matching
    # output[:, :, :H] + output[:, :, H:], plus the summed final states.
    for s in range(L):
        fwd_h = hseq_sc[s]              # rows [:B] = forward hidden @ time s
        bwd_h = hseq_sc[L - 1 - s]      # rows [B:] = backward hidden @ time s
        out_ref[s] = fwd_h[0:B, :] + bwd_h[B:B2, :]

    hn_ref[...] = h[0:B, :] + h[B:B2, :]
    cn_ref[...] = c[0:B, :] + c[B:B2, :]


# ----------------------------------------------------------------------------
# Parameter construction (deterministic, matches nn.Embedding / nn.LSTM shapes)
# ----------------------------------------------------------------------------
def init_encoder_params(key, vocb_size, vocb_dim, hidden_dim):
    ks = jax.random.split(key, 9)
    k_scale = 1.0 / jnp.sqrt(hidden_dim)
    u = lambda k, shape: jax.random.uniform(k, shape, jnp.float32,
                                            -k_scale, k_scale)
    return {
        "embedding": jax.random.normal(ks[0], (vocb_size, vocb_dim), jnp.float32),
        # forward direction (layer 0)
        "w_ih_f": u(ks[1], (4 * hidden_dim, vocb_dim)),
        "w_hh_f": u(ks[2], (4 * hidden_dim, hidden_dim)),
        "b_ih_f": u(ks[3], (4 * hidden_dim,)),
        "b_hh_f": u(ks[4], (4 * hidden_dim,)),
        # backward direction (layer 0, reverse)
        "w_ih_b": u(ks[5], (4 * hidden_dim, vocb_dim)),
        "w_hh_b": u(ks[6], (4 * hidden_dim, hidden_dim)),
        "b_ih_b": u(ks[7], (4 * hidden_dim,)),
        "b_hh_b": u(ks[8], (4 * hidden_dim,)),
    }


# ----------------------------------------------------------------------------
# Encoder forward pass (mirrors the PyTorch module semantics)
# ----------------------------------------------------------------------------
@functools.partial(jax.jit, static_argnames=("hidden_dim",))
def encoder_forward(params, x_tokens, init_key, hidden_dim):
    L, B = x_tokens.shape
    H = hidden_dim

    # h0 / c0 ~ Normal(0, 0.01), shape (2, B, H) — matches torch.normal(0, 0.01).
    k_h, k_c = jax.random.split(init_key)
    h0 = 0.01 * jax.random.normal(k_h, (2, B, H), jnp.float32)
    c0 = 0.01 * jax.random.normal(k_c, (2, B, H), jnp.float32)

    # Embedding lookup stays as ONE XLA gather; everything downstream
    # (input projection, recurrence, bidirectional combine) runs in the kernel.
    # TODO(synk): the gather itself could also be fused (one-hot MXU matmul or
    # per-row DMA gather); kept as a single XLA op here for robustness.
    emb = jnp.take(params["embedding"], x_tokens, axis=0)           # (L, B, D)

    row = lambda v: v.reshape(1, -1)        # free metadata reshape for biases
    out, h_n, c_n = pl.pallas_call(
        _encoder_kernel,
        out_shape=(
            jax.ShapeDtypeStruct((L, B, H), jnp.float32),           # summed out
            jax.ShapeDtypeStruct((B, H), jnp.float32),              # h_n
            jax.ShapeDtypeStruct((B, H), jnp.float32),              # c_n
        ),
        scratch_shapes=[
            pltpu.VMEM((L, 2 * B, 4 * H), jnp.float32),             # stacked gx
            pltpu.VMEM((8 * H, H), jnp.float32),                    # stacked Whh
            pltpu.VMEM((L, 2 * B, H), jnp.float32),                 # per-step h
        ],
        compiler_params=pltpu.CompilerParams(
            vmem_limit_bytes=32 * 1024 * 1024),
    )(emb.reshape(L * B, -1),                                       # (L*B, D)
      params["w_ih_f"], params["w_ih_b"],
      row(params["b_ih_f"]), row(params["b_hh_f"]),
      row(params["b_ih_b"]), row(params["b_hh_b"]),
      params["w_hh_f"], params["w_hh_b"],
      h0.reshape(2 * B, H), c0.reshape(2 * B, H))

    return out, (h_n, c_n)


# ----------------------------------------------------------------------------
# Pure-JAX reference (lax.scan LSTM, Precision.HIGHEST) for verification.
# ----------------------------------------------------------------------------
def _reference_forward(params, x_tokens, init_key, hidden_dim):
    L, B = x_tokens.shape
    H = hidden_dim
    HI = jax.lax.Precision.HIGHEST
    k_h, k_c = jax.random.split(init_key)
    h0 = 0.01 * jax.random.normal(k_h, (2, B, H), jnp.float32)
    c0 = 0.01 * jax.random.normal(k_c, (2, B, H), jnp.float32)
    emb = jnp.take(params["embedding"], x_tokens, axis=0)

    def run(w_ih, w_hh, b, h, c, reverse):
        xs = emb[::-1] if reverse else emb

        def cell(carry, x_t):
            h, c = carry
            g = (jnp.dot(x_t, w_ih.T, precision=HI)
                 + jnp.dot(h, w_hh.T, precision=HI) + b)
            i_g, f_g, g_g, o_g = jnp.split(g, 4, axis=-1)
            c = jax.nn.sigmoid(f_g) * c + jax.nn.sigmoid(i_g) * jnp.tanh(g_g)
            h = jax.nn.sigmoid(o_g) * jnp.tanh(c)
            return (h, c), h

        (hT, cT), ys = jax.lax.scan(cell, (h, c), xs)
        if reverse:
            ys = ys[::-1]
        return ys, hT, cT

    b_f = params["b_ih_f"] + params["b_hh_f"]
    b_b = params["b_ih_b"] + params["b_hh_b"]
    yf, hf, cf = run(params["w_ih_f"], params["w_hh_f"], b_f, h0[0], c0[0], False)
    yb, hb, cb = run(params["w_ih_b"], params["w_hh_b"], b_b, h0[1], c0[1], True)
    return yf + yb, (hf + hb, cf + cb)


if __name__ == "__main__":
    vocb_size, vocb_dim, hidden_dim = 50, 16, 32
    seq_len, batch = 8, 4

    root = jax.random.PRNGKey(0)
    k_params, k_tokens, k_init = jax.random.split(root, 3)

    params = init_encoder_params(k_params, vocb_size, vocb_dim, hidden_dim)
    x = jax.random.randint(k_tokens, (seq_len, batch), 0, vocb_size,
                           dtype=jnp.int32)

    output, (h_n, c_n) = encoder_forward(params, x, k_init, hidden_dim)
    jax.block_until_ready((output, h_n, c_n))

    assert output.shape == (seq_len, batch, hidden_dim)
    assert h_n.shape == (batch, hidden_dim)
    assert c_n.shape == (batch, hidden_dim)
    assert output.dtype == jnp.float32

    # Correctness check against a plain-JAX scan LSTM (HIGHEST precision).
    ref_out, (ref_h, ref_c) = _reference_forward(params, x, k_init, hidden_dim)
    assert jnp.allclose(output, ref_out, rtol=2e-2, atol=2e-2)
    assert jnp.allclose(h_n, ref_h, rtol=2e-2, atol=2e-2)
    assert jnp.allclose(c_n, ref_c, rtol=2e-2, atol=2e-2)

    print("KERNEL_OK")
</pallas_src>

<mosaic_0001>
module attributes {stable_mosaic.version = 11 : i64} {
  func.func @_encoder_kernel(%arg0: memref<32x16xf32, #tpu.memory_space<vmem>>, %arg1: memref<128x16xf32, #tpu.memory_space<vmem>>, %arg2: memref<128x16xf32, #tpu.memory_space<vmem>>, %arg3: memref<1x128xf32, #tpu.memory_space<vmem>>, %arg4: memref<1x128xf32, #tpu.memory_space<vmem>>, %arg5: memref<1x128xf32, #tpu.memory_space<vmem>>, %arg6: memref<1x128xf32, #tpu.memory_space<vmem>>, %arg7: memref<128x32xf32, #tpu.memory_space<vmem>>, %arg8: memref<128x32xf32, #tpu.memory_space<vmem>>, %arg9: memref<8x32xf32, #tpu.memory_space<vmem>>, %arg10: memref<8x32xf32, #tpu.memory_space<vmem>>, %arg11: memref<8x4x32xf32, #tpu.memory_space<vmem>>, %arg12: memref<4x32xf32, #tpu.memory_space<vmem>>, %arg13: memref<4x32xf32, #tpu.memory_space<vmem>>, %arg14: memref<8x8x128xf32, #tpu.memory_space<vmem>>, %arg15: memref<256x32xf32, #tpu.memory_space<vmem>>, %arg16: memref<8x8x32xf32, #tpu.memory_space<vmem>>) attributes {dimension_semantics = [], scalar_prefetch = 0 : i64, scratch_operands = 3 : i64, tpu.core_type = #tpu.core_type<tc>} {
    %c0 = arith.constant 0 : index
    %c0_0 = arith.constant 0 : index
    %0 = vector.load %arg0[%c0, %c0_0] : memref<32x16xf32, #tpu.memory_space<vmem>>, vector<32x16xf32>
    %c0_1 = arith.constant 0 : index
    %c0_2 = arith.constant 0 : index
    %1 = vector.load %arg1[%c0_1, %c0_2] : memref<128x16xf32, #tpu.memory_space<vmem>>, vector<128x16xf32>
    %cst = arith.constant dense<0.000000e+00> : vector<32x128xf32>
    %2 = tpu.matmul %0, %1, %cst {dimension_numbers = #tpu.dot_dimension_numbers<[1], [1], [0], [0], [0, 0, 1, 0], [], []>} : vector<32x16xf32>, vector<128x16xf32>, vector<32x128xf32> -> vector<32x128xf32>
    %c0_3 = arith.constant 0 : index
    %c0_4 = arith.constant 0 : index
    %3 = vector.load %arg3[%c0_3, %c0_4] : memref<1x128xf32, #tpu.memory_space<vmem>>, vector<1x128xf32>
    %4 = vector.broadcast %3 : vector<1x128xf32> to vector<32x128xf32>
    %5 = arith.addf %2, %4 : vector<32x128xf32>
    %c0_5 = arith.constant 0 : index
    %c0_6 = arith.constant 0 : index
    %6 = vector.load %arg4[%c0_5, %c0_6] : memref<1x128xf32, #tpu.memory_space<vmem>>, vector<1x128xf32>
    %7 = vector.broadcast %6 : vector<1x128xf32> to vector<32x128xf32>
    %8 = arith.addf %5, %7 : vector<32x128xf32>
    %c0_7 = arith.constant 0 : index
    %c0_8 = arith.constant 0 : index
    %9 = vector.load %arg2[%c0_7, %c0_8] : memref<128x16xf32, #tpu.memory_space<vmem>>, vector<128x16xf32>
    %cst_9 = arith.constant dense<0.000000e+00> : vector<32x128xf32>
    %10 = tpu.matmul %0, %9, %cst_9 {dimension_numbers = #tpu.dot_dimension_numbers<[1], [1], [0], [0], [0, 0, 1, 0], [], []>} : vector<32x16xf32>, vector<128x16xf32>, vector<32x128xf32> -> vector<32x128xf32>
    %c0_10 = arith.constant 0 : index
    %c0_11 = arith.constant 0 : index
    %11 = vector.load %arg5[%c0_10, %c0_11] : memref<1x128xf32, #tpu.memory_space<vmem>>, vector<1x128xf32>
    %12 = vector.broadcast %11 : vector<1x128xf32> to vector<32x128xf32>
    %13 = arith.addf %10, %12 : vector<32x128xf32>
    %c0_12 = arith.constant 0 : index
    %c0_13 = arith.constant 0 : index
    %14 = vector.load %arg6[%c0_12, %c0_13] : memref<1x128xf32, #tpu.memory_space<vmem>>, vector<1x128xf32>
    %15 = vector.broadcast %14 : vector<1x128xf32> to vector<32x128xf32>
    %16 = arith.addf %13, %15 : vector<32x128xf32>
    %17 = vector.extract_strided_slice %8 {offsets = [0, 0], sizes = [4, 128], strides = [1, 1]} : vector<32x128xf32> to vector<4x128xf32>
    %c0_14 = arith.constant 0 : index
    %c0_15 = arith.constant 0 : index
    %c0_16 = arith.constant 0 : index
    %18 = vector.load %arg14[%c0_14, %c0_15, %c0_16] : memref<8x8x128xf32, #tpu.memory_space<vmem>>, vector<1x4x128xf32>
    %19 = vector.shape_cast %18 : vector<1x4x128xf32> to vector<4x128xf32>
    %20 = vector.shape_cast %17 : vector<4x128xf32> to vector<1x4x128xf32>
    tpu.vector_store %arg14[%c0_14, %c0_15, %c0_16], %20 {strides = array<i32>} : memref<8x8x128xf32, #tpu.memory_space<vmem>>, vector<1x4x128xf32>,
    %21 = vector.extract_strided_slice %16 {offsets = [28, 0], sizes = [4, 128], strides = [1, 1]} : vector<32x128xf32> to vector<4x128xf32>
    %c0_17 = arith.constant 0 : index
    %c4 = arith.constant 4 : index
    %c0_18 = arith.constant 0 : index
    %22 = vector.load %arg14[%c0_17, %c4, %c0_18] : memref<8x8x128xf32, #tpu.memory_space<vmem>>, vector<1x4x128xf32>
    %23 = vector.shape_cast %22 : vector<1x4x128xf32> to vector<4x128xf32>
    %24 = vector.shape_cast %21 : vector<4x128xf32> to vector<1x4x128xf32>
    tpu.vector_store %arg14[%c0_17, %c4, %c0_18], %24 {strides = array<i32>} : memref<8x8x128xf32, #tpu.memory_space<vmem>>, vector<1x4x128xf32>,
    %25 = vector.extract_strided_slice %8 {offsets = [4, 0], sizes = [4, 128], strides = [1, 1]} : vector<32x128xf32> to vector<4x128xf32>
    %c1 = arith.constant 1 : index
    %c0_19 = arith.constant 0 : index
    %c0_20 = arith.constant 0 : index
    %26 = vector.load %arg14[%c1, %c0_19, %c0_20] : memref<8x8x128xf32, #tpu.memory_space<vmem>>, vector<1x4x128xf32>
    %27 = vector.shape_cast %26 : vector<1x4x128xf32> to vector<4x128xf32>
    %28 = vector.shape_cast %25 : vector<4x128xf32> to vector<1x4x128xf32>
    tpu.vector_store %arg14[%c1, %c0_19, %c0_20], %28 {strides = array<i32>} : memref<8x8x128xf32, #tpu.memory_space<vmem>>, vector<1x4x128xf32>,
    %29 = vector.extract_strided_slice %16 {offsets = [24, 0], sizes = [4, 128], strides = [1, 1]} : vector<32x128xf32> to vector<4x128xf32>
    %c1_21 = arith.constant 1 : index
    %c4_22 = arith.constant 4 : index
    %c0_23 = arith.constant 0 : index
    %30 = vector.load %arg14[%c1_21, %c4_22, %c0_23] : memref<8x8x128xf32, #tpu.memory_space<vmem>>, vector<1x4x128xf32>
    %31 = vector.shape_cast %30 : vector<1x4x128xf32> to vector<4x128xf32>
    %32 = vector.shape_cast %29 : vector<4x128xf32> to vector<1x4x128xf32>
    tpu.vector_store %arg14[%c1_21, %c4_22, %c0_23], %32 {strides = array<i32>} : memref<8x8x128xf32, #tpu.memory_space<vmem>>, vector<1x4x128xf32>,
    %33 = vector.extract_strided_slice %8 {offsets = [8, 0], sizes = [4, 128], strides = [1, 1]} : vector<32x128xf32> to vector<4x128xf32>
    %c2 = arith.constant 2 : index
    %c0_24 = arith.constant 0 : index
    %c0_25 = arith.constant 0 : index
    %34 = vector.load %arg14[%c2, %c0_24, %c0_25] : memref<8x8x128xf32, #tpu.memory_space<vmem>>, vector<1x4x128xf32>
    %35 = vector.shape_cast %34 : vector<1x4x128xf32> to vector<4x128xf32>
    %36 = vector.shape_cast %33 : vector<4x128xf32> to vector<1x4x128xf32>
    tpu.vector_store %arg14[%c2, %c0_24, %c0_25], %36 {strides = array<i32>} : memref<8x8x128xf32, #tpu.memory_space<vmem>>, vector<1x4x128xf32>,
    %37 = vector.extract_strided_slice %16 {offsets = [20, 0], sizes = [4, 128], strides = [1, 1]} : vector<32x128xf32> to vector<4x128xf32>
    %c2_26 = arith.constant 2 : index
    %c4_27 = arith.constant 4 : index
    %c0_28 = arith.constant 0 : index
    %38 = vector.load %arg14[%c2_26, %c4_27, %c0_28] : memref<8x8x128xf32, #tpu.memory_space<vmem>>, vector<1x4x128xf32>
    %39 = vector.shape_cast %38 : vector<1x4x128xf32> to vector<4x128xf32>
    %40 = vector.shape_cast %37 : vector<4x128xf32> to vector<1x4x128xf32>
    tpu.vector_store %arg14[%c2_26, %c4_27, %c0_28], %40 {strides = array<i32>} : memref<8x8x128xf32, #tpu.memory_space<vmem>>, vector<1x4x128xf32>,
    %41 = vector.extract_strided_slice %8 {offsets = [12, 0], sizes = [4, 128], strides = [1, 1]} : vector<32x128xf32> to vector<4x128xf32>
    %c3 = arith.constant 3 : index
    %c0_29 = arith.constant 0 : index
    %c0_30 = arith.constant 0 : index
    %42 = vector.load %arg14[%c3, %c0_29, %c0_30] : memref<8x8x128xf32, #tpu.memory_space<vmem>>, vector<1x4x128xf32>
    %43 = vector.shape_cast %42 : vector<1x4x128xf32> to vector<4x128xf32>
    %44 = vector.shape_cast %41 : vector<4x128xf32> to vector<1x4x128xf32>
    tpu.vector_store %arg14[%c3, %c0_29, %c0_30], %44 {strides = array<i32>} : memref<8x8x128xf32, #tpu.memory_space<vmem>>, vector<1x4x128xf32>,
    %45 = vector.extract_strided_slice %16 {offsets = [16, 0], sizes = [4, 128], strides = [1, 1]} : vector<32x128xf32> to vector<4x128xf32>
    %c3_31 = arith.constant 3 : index
    %c4_32 = arith.constant 4 : index
    %c0_33 = arith.constant 0 : index
    %46 = vector.load %arg14[%c3_31, %c4_32, %c0_33] : memref<8x8x128xf32, #tpu.memory_space<vmem>>, vector<1x4x128xf32>
    %47 = vector.shape_cast %46 : vector<1x4x128xf32> to vector<4x128xf32>
    %48 = vector.shape_cast %45 : vector<4x128xf32> to vector<1x4x128xf32>
    tpu.vector_store %arg14[%c3_31, %c4_32, %c0_33], %48 {strides = array<i32>} : memref<8x8x128xf32, #tpu.memory_space<vmem>>, vector<1x4x128xf32>,
    %49 = vector.extract_strided_slice %8 {offsets = [16, 0], sizes = [4, 128], strides = [1, 1]} : vector<32x128xf32> to vector<4x128xf32>
    %c4_34 = arith.constant 4 : index
    %c0_35 = arith.constant 0 : index
    %c0_36 = arith.constant 0 : index
    %50 = vector.load %arg14[%c4_34, %c0_35, %c0_36] : memref<8x8x128xf32, #tpu.memory_space<vmem>>, vector<1x4x128xf32>
    %51 = vector.shape_cast %50 : vector<1x4x128xf32> to vector<4x128xf32>
    %52 = vector.shape_cast %49 : vector<4x128xf32> to vector<1x4x128xf32>
    tpu.vector_store %arg14[%c4_34, %c0_35, %c0_36], %52 {strides = array<i32>} : memref<8x8x128xf32, #tpu.memory_space<vmem>>, vector<1x4x128xf32>,
    %53 = vector.extract_strided_slice %16 {offsets = [12, 0], sizes = [4, 128], strides = [1, 1]} : vector<32x128xf32> to vector<4x128xf32>
    %c4_37 = arith.constant 4 : index
    %c4_38 = arith.constant 4 : index
    %c0_39 = arith.constant 0 : index
    %54 = vector.load %arg14[%c4_37, %c4_38, %c0_39] : memref<8x8x128xf32, #tpu.memory_space<vmem>>, vector<1x4x128xf32>
    %55 = vector.shape_cast %54 : vector<1x4x128xf32> to vector<4x128xf32>
    %56 = vector.shape_cast %53 : vector<4x128xf32> to vector<1x4x128xf32>
    tpu.vector_store %arg14[%c4_37, %c4_38, %c0_39], %56 {strides = array<i32>} : memref<8x8x128xf32, #tpu.memory_space<vmem>>, vector<1x4x128xf32>,
    %57 = vector.extract_strided_slice %8 {offsets = [20, 0], sizes = [4, 128], strides = [1, 1]} : vector<32x128xf32> to vector<4x128xf32>
    %c5 = arith.constant 5 : index
    %c0_40 = arith.constant 0 : index
    %c0_41 = arith.constant 0 : index
    %58 = vector.load %arg14[%c5, %c0_40, %c0_41] : memref<8x8x128xf32, #tpu.memory_space<vmem>>, vector<1x4x128xf32>
    %59 = vector.shape_cast %58 : vector<1x4x128xf32> to vector<4x128xf32>
    %60 = vector.shape_cast %57 : vector<4x128xf32> to vector<1x4x128xf32>
    tpu.vector_store %arg14[%c5, %c0_40, %c0_41], %60 {strides = array<i32>} : memref<8x8x128xf32, #tpu.memory_space<vmem>>, vector<1x4x128xf32>,
    %61 = vector.extract_strided_slice %16 {offsets = [8, 0], sizes = [4, 128], strides = [1, 1]} : vector<32x128xf32> to vector<4x128xf32>
    %c5_42 = arith.constant 5 : index
    %c4_43 = arith.constant 4 : index
    %c0_44 = arith.constant 0 : index
    %62 = vector.load %arg14[%c5_42, %c4_43, %c0_44] : memref<8x8x128xf32, #tpu.memory_space<vmem>>, vector<1x4x128xf32>
    %63 = vector.shape_cast %62 : vector<1x4x128xf32> to vector<4x128xf32>
    %64 = vector.shape_cast %61 : vector<4x128xf32> to vector<1x4x128xf32>
    tpu.vector_store %arg14[%c5_42, %c4_43, %c0_44], %64 {strides = array<i32>} : memref<8x8x128xf32, #tpu.memory_space<vmem>>, vector<1x4x128xf32>,
    %65 = vector.extract_strided_slice %8 {offsets = [24, 0], sizes = [4, 128], strides = [1, 1]} : vector<32x128xf32> to vector<4x128xf32>
    %c6 = arith.constant 6 : index
    %c0_45 = arith.constant 0 : index
    %c0_46 = arith.constant 0 : index
    %66 = vector.load %arg14[%c6, %c0_45, %c0_46] : memref<8x8x128xf32, #tpu.memory_space<vmem>>, vector<1x4x128xf32>
    %67 = vector.shape_cast %66 : vector<1x4x128xf32> to vector<4x128xf32>
    %68 = vector.shape_cast %65 : vector<4x128xf32> to vector<1x4x128xf32>
    tpu.vector_store %arg14[%c6, %c0_45, %c0_46], %68 {strides = array<i32>} : memref<8x8x128xf32, #tpu.memory_space<vmem>>, vector<1x4x128xf32>,
    %69 = vector.extract_strided_slice %16 {offsets = [4, 0], sizes = [4, 128], strides = [1, 1]} : vector<32x128xf32> to vector<4x128xf32>
    %c6_47 = arith.constant 6 : index
    %c4_48 = arith.constant 4 : index
    %c0_49 = arith.constant 0 : index
    %70 = vector.load %arg14[%c6_47, %c4_48, %c0_49] : memref<8x8x128xf32, #tpu.memory_space<vmem>>, vector<1x4x128xf32>
    %71 = vector.shape_cast %70 : vector<1x4x128xf32> to vector<4x128xf32>
    %72 = vector.shape_cast %69 : vector<4x128xf32> to vector<1x4x128xf32>
    tpu.vector_store %arg14[%c6_47, %c4_48, %c0_49], %72 {strides = array<i32>} : memref<8x8x128xf32, #tpu.memory_space<vmem>>, vector<1x4x128xf32>,
    %73 = vector.extract_strided_slice %8 {offsets = [28, 0], sizes = [4, 128], strides = [1, 1]} : vector<32x128xf32> to vector<4x128xf32>
    %c7 = arith.constant 7 : index
    %c0_50 = arith.constant 0 : index
    %c0_51 = arith.constant 0 : index
    %74 = vector.load %arg14[%c7, %c0_50, %c0_51] : memref<8x8x128xf32, #tpu.memory_space<vmem>>, vector<1x4x128xf32>
    %75 = vector.shape_cast %74 : vector<1x4x128xf32> to vector<4x128xf32>
    %76 = vector.shape_cast %73 : vector<4x128xf32> to vector<1x4x128xf32>
    tpu.vector_store %arg14[%c7, %c0_50, %c0_51], %76 {strides = array<i32>} : memref<8x8x128xf32, #tpu.memory_space<vmem>>, vector<1x4x128xf32>,
    %77 = vector.extract_strided_slice %16 {offsets = [0, 0], sizes = [4, 128], strides = [1, 1]} : vector<32x128xf32> to vector<4x128xf32>
    %c7_52 = arith.constant 7 : index
    %c4_53 = arith.constant 4 : index
    %c0_54 = arith.constant 0 : index
    %78 = vector.load %arg14[%c7_52, %c4_53, %c0_54] : memref<8x8x128xf32, #tpu.memory_space<vmem>>, vector<1x4x128xf32>
    %79 = vector.shape_cast %78 : vector<1x4x128xf32> to vector<4x128xf32>
    %80 = vector.shape_cast %77 : vector<4x128xf32> to vector<1x4x128xf32>
    tpu.vector_store %arg14[%c7_52, %c4_53, %c0_54], %80 {strides = array<i32>} : memref<8x8x128xf32, #tpu.memory_space<vmem>>, vector<1x4x128xf32>,
    %c0_55 = arith.constant 0 : index
    %c0_56 = arith.constant 0 : index
    %81 = vector.load %arg7[%c0_55, %c0_56] : memref<128x32xf32, #tpu.memory_space<vmem>>, vector<128x32xf32>
    %c0_57 = arith.constant 0 : index
    %c0_58 = arith.constant 0 : index
    %82 = vector.load %arg15[%c0_57, %c0_58] : memref<256x32xf32, #tpu.memory_space<vmem>>, vector<128x32xf32>
    tpu.vector_store %arg15[%c0_57, %c0_58], %81 {strides = array<i32>} : memref<256x32xf32, #tpu.memory_space<vmem>>, vector<128x32xf32>,
    %c0_59 = arith.constant 0 : index
    %c0_60 = arith.constant 0 : index
    %83 = vector.load %arg8[%c0_59, %c0_60] : memref<128x32xf32, #tpu.memory_space<vmem>>, vector<128x32xf32>
    %c128 = arith.constant 128 : index
    %c0_61 = arith.constant 0 : index
    %84 = vector.load %arg15[%c128, %c0_61] : memref<256x32xf32, #tpu.memory_space<vmem>>, vector<128x32xf32>
    tpu.vector_store %arg15[%c128, %c0_61], %83 {strides = array<i32>} : memref<256x32xf32, #tpu.memory_space<vmem>>, vector<128x32xf32>,
    %c0_62 = arith.constant 0 : index
    %c0_63 = arith.constant 0 : index
    %85 = vector.load %arg15[%c0_62, %c0_63] : memref<256x32xf32, #tpu.memory_space<vmem>>, vector<256x32xf32>
    %86 = tpu.iota {dimensions = array<i32: 0>} : vector<8x128xi32>
    %c4_i32 = arith.constant 4 : i32
    %87 = vector.broadcast %c4_i32 : i32 to vector<8x128xi32>
    %88 = arith.cmpi slt, %86, %87 : vector<8x128xi32>
    %c0_64 = arith.constant 0 : index
    %c0_65 = arith.constant 0 : index
    %89 = vector.load %arg9[%c0_64, %c0_65] : memref<8x32xf32, #tpu.memory_space<vmem>>, vector<8x32xf32>
    %c0_66 = arith.constant 0 : index
    %c0_67 = arith.constant 0 : index
    %90 = vector.load %arg10[%c0_66, %c0_67] : memref<8x32xf32, #tpu.memory_space<vmem>>, vector<8x32xf32>
    %c0_68 = arith.constant 0 : index
    %c0_69 = arith.constant 0 : index
    %c0_70 = arith.constant 0 : index
    %91 = vector.load %arg14[%c0_68, %c0_69, %c0_70] : memref<8x8x128xf32, #tpu.memory_space<vmem>>, vector<1x8x128xf32>
    %92 = vector.shape_cast %91 : vector<1x8x128xf32> to vector<8x128xf32>
    %cst_71 = arith.constant dense<0.000000e+00> : vector<8x256xf32>
    %93 = tpu.matmul %89, %85, %cst_71 {dimension_numbers = #tpu.dot_dimension_numbers<[1], [1], [0], [0], [0, 0, 1, 0], [], []>} : vector<8x32xf32>, vector<256x32xf32>, vector<8x256xf32> -> vector<8x256xf32>
    %94 = vector.extract_strided_slice %93 {offsets = [0, 0], sizes = [8, 128], strides = [1, 1]} : vector<8x256xf32> to vector<8x128xf32>
    %95 = vector.extract_strided_slice %93 {offsets = [0, 128], sizes = [8, 128], strides = [1, 1]} : vector<8x256xf32> to vector<8x128xf32>
    %96 = arith.select %88, %94, %95 : vector<8x128xi1>, vector<8x128xf32>
    %97 = arith.addf %92, %96 : vector<8x128xf32>
    %98 = arith.negf %97 : vector<8x128xf32>
    %99 = math.exp %98 : vector<8x128xf32>
    %cst_72 = arith.constant 1.000000e+00 : f32
    %100 = vector.broadcast %cst_72 : f32 to vector<8x128xf32>
    %101 = arith.addf %100, %99 : vector<8x128xf32>
    %102 = arith.divf %100, %101 : vector<8x128xf32>
    %103 = vector.extract_strided_slice %102 {offsets = [0, 0], sizes = [8, 32], strides = [1, 1]} : vector<8x128xf32> to vector<8x32xf32>
    %104 = vector.extract_strided_slice %102 {offsets = [0, 32], sizes = [8, 32], strides = [1, 1]} : vector<8x128xf32> to vector<8x32xf32>
    %105 = vector.extract_strided_slice %102 {offsets = [0, 96], sizes = [8, 32], strides = [1, 1]} : vector<8x128xf32> to vector<8x32xf32>
    %106 = vector.extract_strided_slice %97 {offsets = [0, 64], sizes = [8, 32], strides = [1, 1]} : vector<8x128xf32> to vector<8x32xf32>
    %107 = math.tanh %106 : vector<8x32xf32>
    %108 = arith.mulf %104, %90 : vector<8x32xf32>
    %109 = arith.mulf %103, %107 : vector<8x32xf32>
    %110 = arith.addf %108, %109 : vector<8x32xf32>
    %111 = math.tanh %110 : vector<8x32xf32>
    %112 = arith.mulf %105, %111 : vector<8x32xf32>
    %c0_73 = arith.constant 0 : index
    %c0_74 = arith.constant 0 : index
    %c0_75 = arith.constant 0 : index
    %113 = vector.load %arg16[%c0_73, %c0_74, %c0_75] : memref<8x8x32xf32, #tpu.memory_space<vmem>>, vector<1x8x32xf32>
    %114 = vector.shape_cast %113 : vector<1x8x32xf32> to vector<8x32xf32>
    %115 = vector.shape_cast %112 : vector<8x32xf32> to vector<1x8x32xf32>
    tpu.vector_store %arg16[%c0_73, %c0_74, %c0_75], %115 {strides = array<i32>} : memref<8x8x32xf32, #tpu.memory_space<vmem>>, vector<1x8x32xf32>,
    %c1_76 = arith.constant 1 : index
    %c0_77 = arith.constant 0 : index
    %c0_78 = arith.constant 0 : index
    %116 = vector.load %arg14[%c1_76, %c0_77, %c0_78] : memref<8x8x128xf32, #tpu.memory_space<vmem>>, vector<1x8x128xf32>
    %117 = vector.shape_cast %116 : vector<1x8x128xf32> to vector<8x128xf32>
    %cst_79 = arith.constant dense<0.000000e+00> : vector<8x256xf32>
    %118 = tpu.matmul %112, %85, %cst_79 {dimension_numbers = #tpu.dot_dimension_numbers<[1], [1], [0], [0], [0, 0, 1, 0], [], []>} : vector<8x32xf32>, vector<256x32xf32>, vector<8x256xf32> -> vector<8x256xf32>
    %119 = vector.extract_strided_slice %118 {offsets = [0, 0], sizes = [8, 128], strides = [1, 1]} : vector<8x256xf32> to vector<8x128xf32>
    %120 = vector.extract_strided_slice %118 {offsets = [0, 128], sizes = [8, 128], strides = [1, 1]} : vector<8x256xf32> to vector<8x128xf32>
    %121 = arith.select %88, %119, %120 : vector<8x128xi1>, vector<8x128xf32>
    %122 = arith.addf %117, %121 : vector<8x128xf32>
    %123 = arith.negf %122 : vector<8x128xf32>
    %124 = math.exp %123 : vector<8x128xf32>
    %cst_80 = arith.constant 1.000000e+00 : f32
    %125 = vector.broadcast %cst_80 : f32 to vector<8x128xf32>
    %126 = arith.addf %125, %124 : vector<8x128xf32>
    %127 = arith.divf %125, %126 : vector<8x128xf32>
    %128 = vector.extract_strided_slice %127 {offsets = [0, 0], sizes = [8, 32], strides = [1, 1]} : vector<8x128xf32> to vector<8x32xf32>
    %129 = vector.extract_strided_slice %127 {offsets = [0, 32], sizes = [8, 32], strides = [1, 1]} : vector<8x128xf32> to vector<8x32xf32>
    %130 = vector.extract_strided_slice %127 {offsets = [0, 96], sizes = [8, 32], strides = [1, 1]} : vector<8x128xf32> to vector<8x32xf32>
    %131 = vector.extract_strided_slice %122 {offsets = [0, 64], sizes = [8, 32], strides = [1, 1]} : vector<8x128xf32> to vector<8x32xf32>
    %132 = math.tanh %131 : vector<8x32xf32>
    %133 = arith.mulf %129, %110 : vector<8x32xf32>
    %134 = arith.mulf %128, %132 : vector<8x32xf32>
    %135 = arith.addf %133, %134 : vector<8x32xf32>
    %136 = math.tanh %135 : vector<8x32xf32>
    %137 = arith.mulf %130, %136 : vector<8x32xf32>
    %c1_81 = arith.constant 1 : index
    %c0_82 = arith.constant 0 : index
    %c0_83 = arith.constant 0 : index
    %138 = vector.load %arg16[%c1_81, %c0_82, %c0_83] : memref<8x8x32xf32, #tpu.memory_space<vmem>>, vector<1x8x32xf32>
    %139 = vector.shape_cast %138 : vector<1x8x32xf32> to vector<8x32xf32>
    %140 = vector.shape_cast %137 : vector<8x32xf32> to vector<1x8x32xf32>
    tpu.vector_store %arg16[%c1_81, %c0_82, %c0_83], %140 {strides = array<i32>} : memref<8x8x32xf32, #tpu.memory_space<vmem>>, vector<1x8x32xf32>,
    %c2_84 = arith.constant 2 : index
    %c0_85 = arith.constant 0 : index
    %c0_86 = arith.constant 0 : index
    %141 = vector.load %arg14[%c2_84, %c0_85, %c0_86] : memref<8x8x128xf32, #tpu.memory_space<vmem>>, vector<1x8x128xf32>
    %142 = vector.shape_cast %141 : vector<1x8x128xf32> to vector<8x128xf32>
    %cst_87 = arith.constant dense<0.000000e+00> : vector<8x256xf32>
    %143 = tpu.matmul %137, %85, %cst_87 {dimension_numbers = #tpu.dot_dimension_numbers<[1], [1], [0], [0], [0, 0, 1, 0], [], []>} : vector<8x32xf32>, vector<256x32xf32>, vector<8x256xf32> -> vector<8x256xf32>
    %144 = vector.extract_strided_slice %143 {offsets = [0, 0], sizes = [8, 128], strides = [1, 1]} : vector<8x256xf32> to vector<8x128xf32>
    %145 = vector.extract_strided_slice %143 {offsets = [0, 128], sizes = [8, 128], strides = [1, 1]} : vector<8x256xf32> to vector<8x128xf32>
    %146 = arith.select %88, %144, %145 : vector<8x128xi1>, vector<8x128xf32>
    %147 = arith.addf %142, %146 : vector<8x128xf32>
    %148 = arith.negf %147 : vector<8x128xf32>
    %149 = math.exp %148 : vector<8x128xf32>
    %cst_88 = arith.constant 1.000000e+00 : f32
    %150 = vector.broadcast %cst_88 : f32 to vector<8x128xf32>
    %151 = arith.addf %150, %149 : vector<8x128xf32>
    %152 = arith.divf %150, %151 : vector<8x128xf32>
    %153 = vector.extract_strided_slice %152 {offsets = [0, 0], sizes = [8, 32], strides = [1, 1]} : vector<8x128xf32> to vector<8x32xf32>
    %154 = vector.extract_strided_slice %152 {offsets = [0, 32], sizes = [8, 32], strides = [1, 1]} : vector<8x128xf32> to vector<8x32xf32>
    %155 = vector.extract_strided_slice %152 {offsets = [0, 96], sizes = [8, 32], strides = [1, 1]} : vector<8x128xf32> to vector<8x32xf32>
    %156 = vector.extract_strided_slice %147 {offsets = [0, 64], sizes = [8, 32], strides = [1, 1]} : vector<8x128xf32> to vector<8x32xf32>
    %157 = math.tanh %156 : vector<8x32xf32>
    %158 = arith.mulf %154, %135 : vector<8x32xf32>
    %159 = arith.mulf %153, %157 : vector<8x32xf32>
    %160 = arith.addf %158, %159 : vector<8x32xf32>
    %161 = math.tanh %160 : vector<8x32xf32>
    %162 = arith.mulf %155, %161 : vector<8x32xf32>
    %c2_89 = arith.constant 2 : index
    %c0_90 = arith.constant 0 : index
    %c0_91 = arith.constant 0 : index
    %163 = vector.load %arg16[%c2_89, %c0_90, %c0_91] : memref<8x8x32xf32, #tpu.memory_space<vmem>>, vector<1x8x32xf32>
    %164 = vector.shape_cast %163 : vector<1x8x32xf32> to vector<8x32xf32>
    %165 = vector.shape_cast %162 : vector<8x32xf32> to vector<1x8x32xf32>
    tpu.vector_store %arg16[%c2_89, %c0_90, %c0_91], %165 {strides = array<i32>} : memref<8x8x32xf32, #tpu.memory_space<vmem>>, vector<1x8x32xf32>,
    %c3_92 = arith.constant 3 : index
    %c0_93 = arith.constant 0 : index
    %c0_94 = arith.constant 0 : index
    %166 = vector.load %arg14[%c3_92, %c0_93, %c0_94] : memref<8x8x128xf32, #tpu.memory_space<vmem>>, vector<1x8x128xf32>
    %167 = vector.shape_cast %166 : vector<1x8x128xf32> to vector<8x128xf32>
    %cst_95 = arith.constant dense<0.000000e+00> : vector<8x256xf32>
    %168 = tpu.matmul %162, %85, %cst_95 {dimension_numbers = #tpu.dot_dimension_numbers<[1], [1], [0], [0], [0, 0, 1, 0], [], []>} : vector<8x32xf32>, vector<256x32xf32>, vector<8x256xf32> -> vector<8x256xf32>
    %169 = vector.extract_strided_slice %168 {offsets = [0, 0], sizes = [8, 128], strides = [1, 1]} : vector<8x256xf32> to vector<8x128xf32>
    %170 = vector.extract_strided_slice %168 {offsets = [0, 128], sizes = [8, 128], strides = [1, 1]} : vector<8x256xf32> to vector<8x128xf32>
    %171 = arith.select %88, %169, %170 : vector<8x128xi1>, vector<8x128xf32>
    %172 = arith.addf %167, %171 : vector<8x128xf32>
    %173 = arith.negf %172 : vector<8x128xf32>
    %174 = math.exp %173 : vector<8x128xf32>
    %cst_96 = arith.constant 1.000000e+00 : f32
    %175 = vector.broadcast %cst_96 : f32 to vector<8x128xf32>
    %176 = arith.addf %175, %174 : vector<8x128xf32>
    %177 = arith.divf %175, %176 : vector<8x128xf32>
    %178 = vector.extract_strided_slice %177 {offsets = [0, 0], sizes = [8, 32], strides = [1, 1]} : vector<8x128xf32> to vector<8x32xf32>
    %179 = vector.extract_strided_slice %177 {offsets = [0, 32], sizes = [8, 32], strides = [1, 1]} : vector<8x128xf32> to vector<8x32xf32>
    %180 = vector.extract_strided_slice %177 {offsets = [0, 96], sizes = [8, 32], strides = [1, 1]} : vector<8x128xf32> to vector<8x32xf32>
    %181 = vector.extract_strided_slice %172 {offsets = [0, 64], sizes = [8, 32], strides = [1, 1]} : vector<8x128xf32> to vector<8x32xf32>
    %182 = math.tanh %181 : vector<8x32xf32>
    %183 = arith.mulf %179, %160 : vector<8x32xf32>
    %184 = arith.mulf %178, %182 : vector<8x32xf32>
    %185 = arith.addf %183, %184 : vector<8x32xf32>
    %186 = math.tanh %185 : vector<8x32xf32>
    %187 = arith.mulf %180, %186 : vector<8x32xf32>
    %c3_97 = arith.constant 3 : index
    %c0_98 = arith.constant 0 : index
    %c0_99 = arith.constant 0 : index
    %188 = vector.load %arg16[%c3_97, %c0_98, %c0_99] : memref<8x8x32xf32, #tpu.memory_space<vmem>>, vector<1x8x32xf32>
    %189 = vector.shape_cast %188 : vector<1x8x32xf32> to vector<8x32xf32>
    %190 = vector.shape_cast %187 : vector<8x32xf32> to vector<1x8x32xf32>
    tpu.vector_store %arg16[%c3_97, %c0_98, %c0_99], %190 {strides = array<i32>} : memref<8x8x32xf32, #tpu.memory_space<vmem>>, vector<1x8x32xf32>,
    %c4_100 = arith.constant 4 : index
    %c0_101 = arith.constant 0 : index
    %c0_102 = arith.constant 0 : index
    %191 = vector.load %arg14[%c4_100, %c0_101, %c0_102] : memref<8x8x128xf32, #tpu.memory_space<vmem>>, vector<1x8x128xf32>
    %192 = vector.shape_cast %191 : vector<1x8x128xf32> to vector<8x128xf32>
    %cst_103 = arith.constant dense<0.000000e+00> : vector<8x256xf32>
    %193 = tpu.matmul %187, %85, %cst_103 {dimension_numbers = #tpu.dot_dimension_numbers<[1], [1], [0], [0], [0, 0, 1, 0], [], []>} : vector<8x32xf32>, vector<256x32xf32>, vector<8x256xf32> -> vector<8x256xf32>
    %194 = vector.extract_strided_slice %193 {offsets = [0, 0], sizes = [8, 128], strides = [1, 1]} : vector<8x256xf32> to vector<8x128xf32>
    %195 = vector.extract_strided_slice %193 {offsets = [0, 128], sizes = [8, 128], strides = [1, 1]} : vector<8x256xf32> to vector<8x128xf32>
    %196 = arith.select %88, %194, %195 : vector<8x128xi1>, vector<8x128xf32>
    %197 = arith.addf %192, %196 : vector<8x128xf32>
    %198 = arith.negf %197 : vector<8x128xf32>
    %199 = math.exp %198 : vector<8x128xf32>
    %cst_104 = arith.constant 1.000000e+00 : f32
    %200 = vector.broadcast %cst_104 : f32 to vector<8x128xf32>
    %201 = arith.addf %200, %199 : vector<8x128xf32>
    %202 = arith.divf %200, %201 : vector<8x128xf32>
    %203 = vector.extract_strided_slice %202 {offsets = [0, 0], sizes = [8, 32], strides = [1, 1]} : vector<8x128xf32> to vector<8x32xf32>
    %204 = vector.extract_strided_slice %202 {offsets = [0, 32], sizes = [8, 32], strides = [1, 1]} : vector<8x128xf32> to vector<8x32xf32>
    %205 = vector.extract_strided_slice %202 {offsets = [0, 96], sizes = [8, 32], strides = [1, 1]} : vector<8x128xf32> to vector<8x32xf32>
    %206 = vector.extract_strided_slice %197 {offsets = [0, 64], sizes = [8, 32], strides = [1, 1]} : vector<8x128xf32> to vector<8x32xf32>
    %207 = math.tanh %206 : vector<8x32xf32>
    %208 = arith.mulf %204, %185 : vector<8x32xf32>
    %209 = arith.mulf %203, %207 : vector<8x32xf32>
    %210 = arith.addf %208, %209 : vector<8x32xf32>
    %211 = math.tanh %210 : vector<8x32xf32>
    %212 = arith.mulf %205, %211 : vector<8x32xf32>
    %c4_105 = arith.constant 4 : index
    %c0_106 = arith.constant 0 : index
    %c0_107 = arith.constant 0 : index
    %213 = vector.load %arg16[%c4_105, %c0_106, %c0_107] : memref<8x8x32xf32, #tpu.memory_space<vmem>>, vector<1x8x32xf32>
    %214 = vector.shape_cast %213 : vector<1x8x32xf32> to vector<8x32xf32>
    %215 = vector.shape_cast %212 : vector<8x32xf32> to vector<1x8x32xf32>
    tpu.vector_store %arg16[%c4_105, %c0_106, %c0_107], %215 {strides = array<i32>} : memref<8x8x32xf32, #tpu.memory_space<vmem>>, vector<1x8x32xf32>,
    %c5_108 = arith.constant 5 : index
    %c0_109 = arith.constant 0 : index
    %c0_110 = arith.constant 0 : index
    %216 = vector.load %arg14[%c5_108, %c0_109, %c0_110] : memref<8x8x128xf32, #tpu.memory_space<vmem>>, vector<1x8x128xf32>
    %217 = vector.shape_cast %216 : vector<1x8x128xf32> to vector<8x128xf32>
    %cst_111 = arith.constant dense<0.000000e+00> : vector<8x256xf32>
    %218 = tpu.matmul %212, %85, %cst_111 {dimension_numbers = #tpu.dot_dimension_numbers<[1], [1], [0], [0], [0, 0, 1, 0], [], []>} : vector<8x32xf32>, vector<256x32xf32>, vector<8x256xf32> -> vector<8x256xf32>
    %219 = vector.extract_strided_slice %218 {offsets = [0, 0], sizes = [8, 128], strides = [1, 1]} : vector<8x256xf32> to vector<8x128xf32>
    %220 = vector.extract_strided_slice %218 {offsets = [0, 128], sizes = [8, 128], strides = [1, 1]} : vector<8x256xf32> to vector<8x128xf32>
    %221 = arith.select %88, %219, %220 : vector<8x128xi1>, vector<8x128xf32>
    %222 = arith.addf %217, %221 : vector<8x128xf32>
    %223 = arith.negf %222 : vector<8x128xf32>
    %224 = math.exp %223 : vector<8x128xf32>
    %cst_112 = arith.constant 1.000000e+00 : f32
    %225 = vector.broadcast %cst_112 : f32 to vector<8x128xf32>
    %226 = arith.addf %225, %224 : vector<8x128xf32>
    %227 = arith.divf %225, %226 : vector<8x128xf32>
    %228 = vector.extract_strided_slice %227 {offsets = [0, 0], sizes = [8, 32], strides = [1, 1]} : vector<8x128xf32> to vector<8x32xf32>
    %229 = vector.extract_strided_slice %227 {offsets = [0, 32], sizes = [8, 32], strides = [1, 1]} : vector<8x128xf32> to vector<8x32xf32>
    %230 = vector.extract_strided_slice %227 {offsets = [0, 96], sizes = [8, 32], strides = [1, 1]} : vector<8x128xf32> to vector<8x32xf32>
    %231 = vector.extract_strided_slice %222 {offsets = [0, 64], sizes = [8, 32], strides = [1, 1]} : vector<8x128xf32> to vector<8x32xf32>
    %232 = math.tanh %231 : vector<8x32xf32>
    %233 = arith.mulf %229, %210 : vector<8x32xf32>
    %234 = arith.mulf %228, %232 : vector<8x32xf32>
    %235 = arith.addf %233, %234 : vector<8x32xf32>
    %236 = math.tanh %235 : vector<8x32xf32>
    %237 = arith.mulf %230, %236 : vector<8x32xf32>
    %c5_113 = arith.constant 5 : index
    %c0_114 = arith.constant 0 : index
    %c0_115 = arith.constant 0 : index
    %238 = vector.load %arg16[%c5_113, %c0_114, %c0_115] : memref<8x8x32xf32, #tpu.memory_space<vmem>>, vector<1x8x32xf32>
    %239 = vector.shape_cast %238 : vector<1x8x32xf32> to vector<8x32xf32>
    %240 = vector.shape_cast %237 : vector<8x32xf32> to vector<1x8x32xf32>
    tpu.vector_store %arg16[%c5_113, %c0_114, %c0_115], %240 {strides = array<i32>} : memref<8x8x32xf32, #tpu.memory_space<vmem>>, vector<1x8x32xf32>,
    %c6_116 = arith.constant 6 : index
    %c0_117 = arith.constant 0 : index
    %c0_118 = arith.constant 0 : index
    %241 = vector.load %arg14[%c6_116, %c0_117, %c0_118] : memref<8x8x128xf32, #tpu.memory_space<vmem>>, vector<1x8x128xf32>
    %242 = vector.shape_cast %241 : vector<1x8x128xf32> to vector<8x128xf32>
    %cst_119 = arith.constant dense<0.000000e+00> : vector<8x256xf32>
    %243 = tpu.matmul %237, %85, %cst_119 {dimension_numbers = #tpu.dot_dimension_numbers<[1], [1], [0], [0], [0, 0, 1, 0], [], []>} : vector<8x32xf32>, vector<256x32xf32>, vector<8x256xf32> -> vector<8x256xf32>
    %244 = vector.extract_strided_slice %243 {offsets = [0, 0], sizes = [8, 128], strides = [1, 1]} : vector<8x256xf32> to vector<8x128xf32>
    %245 = vector.extract_strided_slice %243 {offsets = [0, 128], sizes = [8, 128], strides = [1, 1]} : vector<8x256xf32> to vector<8x128xf32>
    %246 = arith.select %88, %244, %245 : vector<8x128xi1>, vector<8x128xf32>
    %247 = arith.addf %242, %246 : vector<8x128xf32>
    %248 = arith.negf %247 : vector<8x128xf32>
    %249 = math.exp %248 : vector<8x128xf32>
    %cst_120 = arith.constant 1.000000e+00 : f32
    %250 = vector.broadcast %cst_120 : f32 to vector<8x128xf32>
    %251 = arith.addf %250, %249 : vector<8x128xf32>
    %252 = arith.divf %250, %251 : vector<8x128xf32>
    %253 = vector.extract_strided_slice %252 {offsets = [0, 0], sizes = [8, 32], strides = [1, 1]} : vector<8x128xf32> to vector<8x32xf32>
    %254 = vector.extract_strided_slice %252 {offsets = [0, 32], sizes = [8, 32], strides = [1, 1]} : vector<8x128xf32> to vector<8x32xf32>
    %255 = vector.extract_strided_slice %252 {offsets = [0, 96], sizes = [8, 32], strides = [1, 1]} : vector<8x128xf32> to vector<8x32xf32>
    %256 = vector.extract_strided_slice %247 {offsets = [0, 64], sizes = [8, 32], strides = [1, 1]} : vector<8x128xf32> to vector<8x32xf32>
    %257 = math.tanh %256 : vector<8x32xf32>
    %258 = arith.mulf %254, %235 : vector<8x32xf32>
    %259 = arith.mulf %253, %257 : vector<8x32xf32>
    %260 = arith.addf %258, %259 : vector<8x32xf32>
    %261 = math.tanh %260 : vector<8x32xf32>
    %262 = arith.mulf %255, %261 : vector<8x32xf32>
    %c6_121 = arith.constant 6 : index
    %c0_122 = arith.constant 0 : index
    %c0_123 = arith.constant 0 : index
    %263 = vector.load %arg16[%c6_121, %c0_122, %c0_123] : memref<8x8x32xf32, #tpu.memory_space<vmem>>, vector<1x8x32xf32>
    %264 = vector.shape_cast %263 : vector<1x8x32xf32> to vector<8x32xf32>
    %265 = vector.shape_cast %262 : vector<8x32xf32> to vector<1x8x32xf32>
    tpu.vector_store %arg16[%c6_121, %c0_122, %c0_123], %265 {strides = array<i32>} : memref<8x8x32xf32, #tpu.memory_space<vmem>>, vector<1x8x32xf32>,
    %c7_124 = arith.constant 7 : index
    %c0_125 = arith.constant 0 : index
    %c0_126 = arith.constant 0 : index
    %266 = vector.load %arg14[%c7_124, %c0_125, %c0_126] : memref<8x8x128xf32, #tpu.memory_space<vmem>>, vector<1x8x128xf32>
    %267 = vector.shape_cast %266 : vector<1x8x128xf32> to vector<8x128xf32>
    %cst_127 = arith.constant dense<0.000000e+00> : vector<8x256xf32>
    %268 = tpu.matmul %262, %85, %cst_127 {dimension_numbers = #tpu.dot_dimension_numbers<[1], [1], [0], [0], [0, 0, 1, 0], [], []>} : vector<8x32xf32>, vector<256x32xf32>, vector<8x256xf32> -> vector<8x256xf32>
    %269 = vector.extract_strided_slice %268 {offsets = [0, 0], sizes = [8, 128], strides = [1, 1]} : vector<8x256xf32> to vector<8x128xf32>
    %270 = vector.extract_strided_slice %268 {offsets = [0, 128], sizes = [8, 128], strides = [1, 1]} : vector<8x256xf32> to vector<8x128xf32>
    %271 = arith.select %88, %269, %270 : vector<8x128xi1>, vector<8x128xf32>
    %272 = arith.addf %267, %271 : vector<8x128xf32>
    %273 = arith.negf %272 : vector<8x128xf32>
    %274 = math.exp %273 : vector<8x128xf32>
    %cst_128 = arith.constant 1.000000e+00 : f32
    %275 = vector.broadcast %cst_128 : f32 to vector<8x128xf32>
    %276 = arith.addf %275, %274 : vector<8x128xf32>
    %277 = arith.divf %275, %276 : vector<8x128xf32>
    %278 = vector.extract_strided_slice %277 {offsets = [0, 0], sizes = [8, 32], strides = [1, 1]} : vector<8x128xf32> to vector<8x32xf32>
    %279 = vector.extract_strided_slice %277 {offsets = [0, 32], sizes = [8, 32], strides = [1, 1]} : vector<8x128xf32> to vector<8x32xf32>
    %280 = vector.extract_strided_slice %277 {offsets = [0, 96], sizes = [8, 32], strides = [1, 1]} : vector<8x128xf32> to vector<8x32xf32>
    %281 = vector.extract_strided_slice %272 {offsets = [0, 64], sizes = [8, 32], strides = [1, 1]} : vector<8x128xf32> to vector<8x32xf32>
    %282 = math.tanh %281 : vector<8x32xf32>
    %283 = arith.mulf %279, %260 : vector<8x32xf32>
    %284 = arith.mulf %278, %282 : vector<8x32xf32>
    %285 = arith.addf %283, %284 : vector<8x32xf32>
    %286 = math.tanh %285 : vector<8x32xf32>
    %287 = arith.mulf %280, %286 : vector<8x32xf32>
    %c7_129 = arith.constant 7 : index
    %c0_130 = arith.constant 0 : index
    %c0_131 = arith.constant 0 : index
    %288 = vector.load %arg16[%c7_129, %c0_130, %c0_131] : memref<8x8x32xf32, #tpu.memory_space<vmem>>, vector<1x8x32xf32>
    %289 = vector.shape_cast %288 : vector<1x8x32xf32> to vector<8x32xf32>
    %290 = vector.shape_cast %287 : vector<8x32xf32> to vector<1x8x32xf32>
    tpu.vector_store %arg16[%c7_129, %c0_130, %c0_131], %290 {strides = array<i32>} : memref<8x8x32xf32, #tpu.memory_space<vmem>>, vector<1x8x32xf32>,
    %c0_132 = arith.constant 0 : index
    %c0_133 = arith.constant 0 : index
    %c0_134 = arith.constant 0 : index
    %291 = vector.load %arg16[%c0_132, %c0_133, %c0_134] : memref<8x8x32xf32, #tpu.memory_space<vmem>>, vector<1x8x32xf32>
    %292 = vector.shape_cast %291 : vector<1x8x32xf32> to vector<8x32xf32>
    %c7_135 = arith.constant 7 : index
    %c0_136 = arith.constant 0 : index
    %c0_137 = arith.constant 0 : index
    %293 = vector.load %arg16[%c7_135, %c0_136, %c0_137] : memref<8x8x32xf32, #tpu.memory_space<vmem>>, vector<1x8x32xf32>
    %294 = vector.shape_cast %293 : vector<1x8x32xf32> to vector<8x32xf32>
    %295 = vector.extract_strided_slice %292 {offsets = [0, 0], sizes = [4, 32], strides = [1, 1]} : vector<8x32xf32> to vector<4x32xf32>
    %296 = vector.extract_strided_slice %294 {offsets = [4, 0], sizes = [4, 32], strides = [1, 1]} : vector<8x32xf32> to vector<4x32xf32>
    %297 = arith.addf %295, %296 : vector<4x32xf32>
    %c0_138 = arith.constant 0 : index
    %c0_139 = arith.constant 0 : index
    %c0_140 = arith.constant 0 : index
    %298 = vector.load %arg11[%c0_138, %c0_139, %c0_140] : memref<8x4x32xf32, #tpu.memory_space<vmem>>, vector<1x4x32xf32>
    %299 = vector.shape_cast %298 : vector<1x4x32xf32> to vector<4x32xf32>
    %300 = vector.shape_cast %297 : vector<4x32xf32> to vector<1x4x32xf32>
    tpu.vector_store %arg11[%c0_138, %c0_139, %c0_140], %300 {strides = array<i32>} : memref<8x4x32xf32, #tpu.memory_space<vmem>>, vector<1x4x32xf32>,
    %c1_141 = arith.constant 1 : index
    %c0_142 = arith.constant 0 : index
    %c0_143 = arith.constant 0 : index
    %301 = vector.load %arg16[%c1_141, %c0_142, %c0_143] : memref<8x8x32xf32, #tpu.memory_space<vmem>>, vector<1x8x32xf32>
    %302 = vector.shape_cast %301 : vector<1x8x32xf32> to vector<8x32xf32>
    %c6_144 = arith.constant 6 : index
    %c0_145 = arith.constant 0 : index
    %c0_146 = arith.constant 0 : index
    %303 = vector.load %arg16[%c6_144, %c0_145, %c0_146] : memref<8x8x32xf32, #tpu.memory_space<vmem>>, vector<1x8x32xf32>
    %304 = vector.shape_cast %303 : vector<1x8x32xf32> to vector<8x32xf32>
    %305 = vector.extract_strided_slice %302 {offsets = [0, 0], sizes = [4, 32], strides = [1, 1]} : vector<8x32xf32> to vector<4x32xf32>
    %306 = vector.extract_strided_slice %304 {offsets = [4, 0], sizes = [4, 32], strides = [1, 1]} : vector<8x32xf32> to vector<4x32xf32>
    %307 = arith.addf %305, %306 : vector<4x32xf32>
    %c1_147 = arith.constant 1 : index
    %c0_148 = arith.constant 0 : index
    %c0_149 = arith.constant 0 : index
    %308 = vector.load %arg11[%c1_147, %c0_148, %c0_149] : memref<8x4x32xf32, #tpu.memory_space<vmem>>, vector<1x4x32xf32>
    %309 = vector.shape_cast %308 : vector<1x4x32xf32> to vector<4x32xf32>
    %310 = vector.shape_cast %307 : vector<4x32xf32> to vector<1x4x32xf32>
    tpu.vector_store %arg11[%c1_147, %c0_148, %c0_149], %310 {strides = array<i32>} : memref<8x4x32xf32, #tpu.memory_space<vmem>>, vector<1x4x32xf32>,
    %c2_150 = arith.constant 2 : index
    %c0_151 = arith.constant 0 : index
    %c0_152 = arith.constant 0 : index
    %311 = vector.load %arg16[%c2_150, %c0_151, %c0_152] : memref<8x8x32xf32, #tpu.memory_space<vmem>>, vector<1x8x32xf32>
    %312 = vector.shape_cast %311 : vector<1x8x32xf32> to vector<8x32xf32>
    %c5_153 = arith.constant 5 : index
    %c0_154 = arith.constant 0 : index
    %c0_155 = arith.constant 0 : index
    %313 = vector.load %arg16[%c5_153, %c0_154, %c0_155] : memref<8x8x32xf32, #tpu.memory_space<vmem>>, vector<1x8x32xf32>
    %314 = vector.shape_cast %313 : vector<1x8x32xf32> to vector<8x32xf32>
    %315 = vector.extract_strided_slice %312 {offsets = [0, 0], sizes = [4, 32], strides = [1, 1]} : vector<8x32xf32> to vector<4x32xf32>
    %316 = vector.extract_strided_slice %314 {offsets = [4, 0], sizes = [4, 32], strides = [1, 1]} : vector<8x32xf32> to vector<4x32xf32>
    %317 = arith.addf %315, %316 : vector<4x32xf32>
    %c2_156 = arith.constant 2 : index
    %c0_157 = arith.constant 0 : index
    %c0_158 = arith.constant 0 : index
    %318 = vector.load %arg11[%c2_156, %c0_157, %c0_158] : memref<8x4x32xf32, #tpu.memory_space<vmem>>, vector<1x4x32xf32>
    %319 = vector.shape_cast %318 : vector<1x4x32xf32> to vector<4x32xf32>
    %320 = vector.shape_cast %317 : vector<4x32xf32> to vector<1x4x32xf32>
    tpu.vector_store %arg11[%c2_156, %c0_157, %c0_158], %320 {strides = array<i32>} : memref<8x4x32xf32, #tpu.memory_space<vmem>>, vector<1x4x32xf32>,
    %c3_159 = arith.constant 3 : index
    %c0_160 = arith.constant 0 : index
    %c0_161 = arith.constant 0 : index
    %321 = vector.load %arg16[%c3_159, %c0_160, %c0_161] : memref<8x8x32xf32, #tpu.memory_space<vmem>>, vector<1x8x32xf32>
    %322 = vector.shape_cast %321 : vector<1x8x32xf32> to vector<8x32xf32>
    %c4_162 = arith.constant 4 : index
    %c0_163 = arith.constant 0 : index
    %c0_164 = arith.constant 0 : index
    %323 = vector.load %arg16[%c4_162, %c0_163, %c0_164] : memref<8x8x32xf32, #tpu.memory_space<vmem>>, vector<1x8x32xf32>
    %324 = vector.shape_cast %323 : vector<1x8x32xf32> to vector<8x32xf32>
    %325 = vector.extract_strided_slice %322 {offsets = [0, 0], sizes = [4, 32], strides = [1, 1]} : vector<8x32xf32> to vector<4x32xf32>
    %326 = vector.extract_strided_slice %324 {offsets = [4, 0], sizes = [4, 32], strides = [1, 1]} : vector<8x32xf32> to vector<4x32xf32>
    %327 = arith.addf %325, %326 : vector<4x32xf32>
    %c3_165 = arith.constant 3 : index
    %c0_166 = arith.constant 0 : index
    %c0_167 = arith.constant 0 : index
    %328 = vector.load %arg11[%c3_165, %c0_166, %c0_167] : memref<8x4x32xf32, #tpu.memory_space<vmem>>, vector<1x4x32xf32>
    %329 = vector.shape_cast %328 : vector<1x4x32xf32> to vector<4x32xf32>
    %330 = vector.shape_cast %327 : vector<4x32xf32> to vector<1x4x32xf32>
    tpu.vector_store %arg11[%c3_165, %c0_166, %c0_167], %330 {strides = array<i32>} : memref<8x4x32xf32, #tpu.memory_space<vmem>>, vector<1x4x32xf32>,
    %c4_168 = arith.constant 4 : index
    %c0_169 = arith.constant 0 : index
    %c0_170 = arith.constant 0 : index
    %331 = vector.load %arg16[%c4_168, %c0_169, %c0_170] : memref<8x8x32xf32, #tpu.memory_space<vmem>>, vector<1x8x32xf32>
    %332 = vector.shape_cast %331 : vector<1x8x32xf32> to vector<8x32xf32>
    %c3_171 = arith.constant 3 : index
    %c0_172 = arith.constant 0 : index
    %c0_173 = arith.constant 0 : index
    %333 = vector.load %arg16[%c3_171, %c0_172, %c0_173] : memref<8x8x32xf32, #tpu.memory_space<vmem>>, vector<1x8x32xf32>
    %334 = vector.shape_cast %333 : vector<1x8x32xf32> to vector<8x32xf32>
    %335 = vector.extract_strided_slice %332 {offsets = [0, 0], sizes = [4, 32], strides = [1, 1]} : vector<8x32xf32> to vector<4x32xf32>
    %336 = vector.extract_strided_slice %334 {offsets = [4, 0], sizes = [4, 32], strides = [1, 1]} : vector<8x32xf32> to vector<4x32xf32>
    %337 = arith.addf %335, %336 : vector<4x32xf32>
    %c4_174 = arith.constant 4 : index
    %c0_175 = arith.constant 0 : index
    %c0_176 = arith.constant 0 : index
    %338 = vector.load %arg11[%c4_174, %c0_175, %c0_176] : memref<8x4x32xf32, #tpu.memory_space<vmem>>, vector<1x4x32xf32>
    %339 = vector.shape_cast %338 : vector<1x4x32xf32> to vector<4x32xf32>
    %340 = vector.shape_cast %337 : vector<4x32xf32> to vector<1x4x32xf32>
    tpu.vector_store %arg11[%c4_174, %c0_175, %c0_176], %340 {strides = array<i32>} : memref<8x4x32xf32, #tpu.memory_space<vmem>>, vector<1x4x32xf32>,
    %c5_177 = arith.constant 5 : index
    %c0_178 = arith.constant 0 : index
    %c0_179 = arith.constant 0 : index
    %341 = vector.load %arg16[%c5_177, %c0_178, %c0_179] : memref<8x8x32xf32, #tpu.memory_space<vmem>>, vector<1x8x32xf32>
    %342 = vector.shape_cast %341 : vector<1x8x32xf32> to vector<8x32xf32>
    %c2_180 = arith.constant 2 : index
    %c0_181 = arith.constant 0 : index
    %c0_182 = arith.constant 0 : index
    %343 = vector.load %arg16[%c2_180, %c0_181, %c0_182] : memref<8x8x32xf32, #tpu.memory_space<vmem>>, vector<1x8x32xf32>
    %344 = vector.shape_cast %343 : vector<1x8x32xf32> to vector<8x32xf32>
    %345 = vector.extract_strided_slice %342 {offsets = [0, 0], sizes = [4, 32], strides = [1, 1]} : vector<8x32xf32> to vector<4x32xf32>
    %346 = vector.extract_strided_slice %344 {offsets = [4, 0], sizes = [4, 32], strides = [1, 1]} : vector<8x32xf32> to vector<4x32xf32>
    %347 = arith.addf %345, %346 : vector<4x32xf32>
    %c5_183 = arith.constant 5 : index
    %c0_184 = arith.constant 0 : index
    %c0_185 = arith.constant 0 : index
    %348 = vector.load %arg11[%c5_183, %c0_184, %c0_185] : memref<8x4x32xf32, #tpu.memory_space<vmem>>, vector<1x4x32xf32>
    %349 = vector.shape_cast %348 : vector<1x4x32xf32> to vector<4x32xf32>
    %350 = vector.shape_cast %347 : vector<4x32xf32> to vector<1x4x32xf32>
    tpu.vector_store %arg11[%c5_183, %c0_184, %c0_185], %350 {strides = array<i32>} : memref<8x4x32xf32, #tpu.memory_space<vmem>>, vector<1x4x32xf32>,
    %c6_186 = arith.constant 6 : index
    %c0_187 = arith.constant 0 : index
    %c0_188 = arith.constant 0 : index
    %351 = vector.load %arg16[%c6_186, %c0_187, %c0_188] : memref<8x8x32xf32, #tpu.memory_space<vmem>>, vector<1x8x32xf32>
    %352 = vector.shape_cast %351 : vector<1x8x32xf32> to vector<8x32xf32>
    %c1_189 = arith.constant 1 : index
    %c0_190 = arith.constant 0 : index
    %c0_191 = arith.constant 0 : index
    %353 = vector.load %arg16[%c1_189, %c0_190, %c0_191] : memref<8x8x32xf32, #tpu.memory_space<vmem>>, vector<1x8x32xf32>
    %354 = vector.shape_cast %353 : vector<1x8x32xf32> to vector<8x32xf32>
    %355 = vector.extract_strided_slice %352 {offsets = [0, 0], sizes = [4, 32], strides = [1, 1]} : vector<8x32xf32> to vector<4x32xf32>
    %356 = vector.extract_strided_slice %354 {offsets = [4, 0], sizes = [4, 32], strides = [1, 1]} : vector<8x32xf32> to vector<4x32xf32>
    %357 = arith.addf %355, %356 : vector<4x32xf32>
    %c6_192 = arith.constant 6 : index
    %c0_193 = arith.constant 0 : index
    %c0_194 = arith.constant 0 : index
    %358 = vector.load %arg11[%c6_192, %c0_193, %c0_194] : memref<8x4x32xf32, #tpu.memory_space<vmem>>, vector<1x4x32xf32>
    %359 = vector.shape_cast %358 : vector<1x4x32xf32> to vector<4x32xf32>
    %360 = vector.shape_cast %357 : vector<4x32xf32> to vector<1x4x32xf32>
    tpu.vector_store %arg11[%c6_192, %c0_193, %c0_194], %360 {strides = array<i32>} : memref<8x4x32xf32, #tpu.memory_space<vmem>>, vector<1x4x32xf32>,
    %c7_195 = arith.constant 7 : index
    %c0_196 = arith.constant 0 : index
    %c0_197 = arith.constant 0 : index
    %361 = vector.load %arg16[%c7_195, %c0_196, %c0_197] : memref<8x8x32xf32, #tpu.memory_space<vmem>>, vector<1x8x32xf32>
    %362 = vector.shape_cast %361 : vector<1x8x32xf32> to vector<8x32xf32>
    %c0_198 = arith.constant 0 : index
    %c0_199 = arith.constant 0 : index
    %c0_200 = arith.constant 0 : index
    %363 = vector.load %arg16[%c0_198, %c0_199, %c0_200] : memref<8x8x32xf32, #tpu.memory_space<vmem>>, vector<1x8x32xf32>
    %364 = vector.shape_cast %363 : vector<1x8x32xf32> to vector<8x32xf32>
    %365 = vector.extract_strided_slice %362 {offsets = [0, 0], sizes = [4, 32], strides = [1, 1]} : vector<8x32xf32> to vector<4x32xf32>
    %366 = vector.extract_strided_slice %364 {offsets = [4, 0], sizes = [4, 32], strides = [1, 1]} : vector<8x32xf32> to vector<4x32xf32>
    %367 = arith.addf %365, %366 : vector<4x32xf32>
    %c7_201 = arith.constant 7 : index
    %c0_202 = arith.constant 0 : index
    %c0_203 = arith.constant 0 : index
    %368 = vector.load %arg11[%c7_201, %c0_202, %c0_203] : memref<8x4x32xf32, #tpu.memory_space<vmem>>, vector<1x4x32xf32>
    %369 = vector.shape_cast %368 : vector<1x4x32xf32> to vector<4x32xf32>
    %370 = vector.shape_cast %367 : vector<4x32xf32> to vector<1x4x32xf32>
    tpu.vector_store %arg11[%c7_201, %c0_202, %c0_203], %370 {strides = array<i32>} : memref<8x4x32xf32, #tpu.memory_space<vmem>>, vector<1x4x32xf32>,
    %371 = vector.extract_strided_slice %287 {offsets = [0, 0], sizes = [4, 32], strides = [1, 1]} : vector<8x32xf32> to vector<4x32xf32>
    %372 = vector.extract_strided_slice %287 {offsets = [4, 0], sizes = [4, 32], strides = [1, 1]} : vector<8x32xf32> to vector<4x32xf32>
    %373 = arith.addf %371, %372 : vector<4x32xf32>
    %c0_204 = arith.constant 0 : index
    %c0_205 = arith.constant 0 : index
    %374 = vector.load %arg12[%c0_204, %c0_205] : memref<4x32xf32, #tpu.memory_space<vmem>>, vector<4x32xf32>
    tpu.vector_store %arg12[%c0_204, %c0_205], %373 {strides = array<i32>} : memref<4x32xf32, #tpu.memory_space<vmem>>, vector<4x32xf32>,
    %375 = vector.extract_strided_slice %285 {offsets = [0, 0], sizes = [4, 32], strides = [1, 1]} : vector<8x32xf32> to vector<4x32xf32>
    %376 = vector.extract_strided_slice %285 {offsets = [4, 0], sizes = [4, 32], strides = [1, 1]} : vector<8x32xf32> to vector<4x32xf32>
    %377 = arith.addf %375, %376 : vector<4x32xf32>
    %c0_206 = arith.constant 0 : index
    %c0_207 = arith.constant 0 : index
    %378 = vector.load %arg13[%c0_206, %c0_207] : memref<4x32xf32, #tpu.memory_space<vmem>>, vector<4x32xf32>
    tpu.vector_store %arg13[%c0_206, %c0_207], %377 {strides = array<i32>} : memref<4x32xf32, #tpu.memory_space<vmem>>, vector<4x32xf32>,
    return
  }
}

</mosaic_0001>

<llo_original>
// kernel: encoder_forward.1
$region0: #{encoder_forward.1}
  #allocation0 [shape = 'u32[]', space=smem, size = 0x4, offset = 0x4, fixed_abs, tag = 'smem constant byte address 0x4 - core index']
  #allocation1 [shape = 'u32[144,128]{1,0:T(1,128)}', space=vmem, size = 0x12000, scoped, tag = 'internal scratch']
  #allocation2 [shape = 'f32[8,8,128]{2,1,0:T(8,128)}', space=vmem, size = 0x8000, scoped, tag = 'scratch operand']
  #allocation3 [shape = 'f32[256,32]{1,0:T(8,128)}', space=vmem, size = 0x20000, scoped, tag = 'scratch operand']
  #allocation4 [shape = 'f32[8,8,32]{2,1,0:T(8,128)}', space=vmem, size = 0x8000, scoped, tag = 'scratch operand']
  %s0 = inlined_call_operand.vmem [shape: f32[32,16], index: 0, kind: input, shape index: {}]
  %s1 = inlined_call_operand.vmem [shape: f32[128,16], index: 1, kind: input, shape index: {}]
  %s2 = inlined_call_operand.vmem [shape: f32[128,16], index: 2, kind: input, shape index: {}]
  %s3 = inlined_call_operand.vmem [shape: f32[1,128], index: 3, kind: input, shape index: {}]
  %s4 = inlined_call_operand.vmem [shape: f32[1,128], index: 4, kind: input, shape index: {}]
  %s5 = inlined_call_operand.vmem [shape: f32[1,128], index: 5, kind: input, shape index: {}]
  %s6 = inlined_call_operand.vmem [shape: f32[1,128], index: 6, kind: input, shape index: {}]
  %s7 = inlined_call_operand.vmem [shape: f32[128,32], index: 7, kind: input, shape index: {}]
  %s8 = inlined_call_operand.vmem [shape: f32[128,32], index: 8, kind: input, shape index: {}]
  %s9 = inlined_call_operand.vmem [shape: f32[8,32], index: 9, kind: input, shape index: {}]
  %s10 = inlined_call_operand.vmem [shape: f32[8,32], index: 10, kind: input, shape index: {}]
  %s11 = inlined_call_operand.hbm [shape: f32[8,4,32], index: 11, kind: output, shape index: {0}]
  %s12 = inlined_call_operand.hbm [shape: f32[4,32], index: 12, kind: output, shape index: {1}]
  %s13 = inlined_call_operand.hbm [shape: f32[4,32], index: 13, kind: output, shape index: {2}]
  %14 = xla_tuple %s11, %s12, %s13
  %s15 = sld [smem:[#allocation0]]
  $region70: #{encoder_forward.1} parent=0
    _
  %s17 = ssub.s32 1, %s15
  %s18 = scalar_select 0, %s17, %s15
  $region1: #{encoder_forward.1} parent=0
    #allocation5 [shape = 'u8[16384]{0}', space=vmem, size = 0x4000, scoped, tag = 'output window, operand 0, single buffered']
    #allocation6 [shape = 's32[1]{0}', space=sflag, size = 0x4, scoped, tag = 'scoped memory for encoder_forward.1']
    #allocation7 [shape = 'u8[2048]{0}', space=vmem, size = 0x800, scoped, tag = 'output window, operand 1, single buffered']
    #allocation8 [shape = 's32[1]{0}', space=sflag, size = 0x4, scoped, tag = 'scoped memory for encoder_forward.1']
    #allocation9 [shape = 'u8[2048]{0}', space=vmem, size = 0x800, scoped, tag = 'output window, operand 2, single buffered']
    %19 = vsyncpa [#allocation6], 0
    %20 = vsyncpa [#allocation8], 0
    // Predicated region
    $region2: #{encoder_forward.1} parent=1 // pred_check
      _
    $region3: #{encoder_forward.1} parent=1 // pred_check_branch
      %22 = sbr.rel (0) target = $region5
    $region4: #{encoder_forward.1} parent=1 // pred_region
      _
    $region5: #{encoder_forward.1} parent=1 // pred_fallthru
      _
    // Predicated region
    $region6: #{encoder_forward.1} parent=1 // pred_check
      _
    $region7: #{encoder_forward.1} parent=1 // pred_check_branch
      %24 = sbr.rel (0) target = $region9
    $region8: #{encoder_forward.1} parent=1 // pred_region
      _
    $region9: #{encoder_forward.1} parent=1 // pred_fallthru
      _
    // Predicated region
    $region10: #{encoder_forward.1} parent=1 // pred_check
      _
    $region11: #{encoder_forward.1} parent=1 // pred_check_branch
      %26 = sbr.rel (0) target = $region13
    $region12: #{encoder_forward.1} parent=1 // pred_region
      _
    $region13: #{encoder_forward.1} parent=1 // pred_fallthru
      _
    // Predicated region
    $region14: #{encoder_forward.1} parent=1 // pred_check
      _
    $region15: #{encoder_forward.1} parent=1 // pred_check_branch
      %28 = sbr.rel (0) target = $region17
    $region16: #{encoder_forward.1} parent=1 // pred_region
      _
    $region17: #{encoder_forward.1} parent=1 // pred_fallthru
      _
    // Predicated region
    $region18: #{encoder_forward.1} parent=1 // pred_check
      _
    $region19: #{encoder_forward.1} parent=1 // pred_check_branch
      %30 = sbr.rel (0) target = $region21
    $region20: #{encoder_forward.1} parent=1 // pred_region
      _
    $region21: #{encoder_forward.1} parent=1 // pred_fallthru
      _
    // Predicated region
    $region22: #{encoder_forward.1} parent=1 // pred_check
      _
    $region23: #{encoder_forward.1} parent=1 // pred_check_branch
      %32 = sbr.rel (0) target = $region25
    $region24: #{encoder_forward.1} parent=1 // pred_region
      _
    $region25: #{encoder_forward.1} parent=1 // pred_fallthru
      _
    // Predicated region
    $region26: #{encoder_forward.1} parent=1 // pred_check
      _
    $region27: #{encoder_forward.1} parent=1 // pred_check_branch
      %34 = sbr.rel (0) target = $region29
    $region28: #{encoder_forward.1} parent=1 // pred_region
      _
    $region29: #{encoder_forward.1} parent=1 // pred_fallthru
      _
    // Predicated region
    $region30: #{encoder_forward.1} parent=1 // pred_check
      _
    $region31: #{encoder_forward.1} parent=1 // pred_check_branch
      %36 = sbr.rel (0) target = $region33
    $region32: #{encoder_forward.1} parent=1 // pred_region
      _
    $region33: #{encoder_forward.1} parent=1 // pred_fallthru
      _
    // Predicated region
    $region34: #{encoder_forward.1} parent=1 // pred_check
      _
    $region35: #{encoder_forward.1} parent=1 // pred_check_branch
      %38 = sbr.rel (0) target = $region37
    $region36: #{encoder_forward.1} parent=1 // pred_region
      _
    $region37: #{encoder_forward.1} parent=1 // pred_fallthru
      _
    // Predicated region
    $region38: #{encoder_forward.1} parent=1 // pred_check
      _
    $region39: #{encoder_forward.1} parent=1 // pred_check_branch
      %40 = sbr.rel (0) target = $region41
    $region40: #{encoder_forward.1} parent=1 // pred_region
      _
    $region41: #{encoder_forward.1} parent=1 // pred_fallthru
      _
    // Predicated region
    $region42: #{encoder_forward.1} parent=1 // pred_check
      _
    $region43: #{encoder_forward.1} parent=1 // pred_check_branch
      %42 = sbr.rel (0) target = $region45
    $region44: #{encoder_forward.1} parent=1 // pred_region
      _
    $region45: #{encoder_forward.1} parent=1 // pred_fallthru
      _
    %v43 = vld [vmem:[%s0] sm:$0xff]
    %v44 = vld [vmem:[%s0 + $0x8] sm:$0xff]
    %v45 = vld [vmem:[%s0 + $0x10] sm:$0xff]
    %v46 = vld [vmem:[%s0 + $0x18] sm:$0xff]
    %v47 = vld [vmem:[%s1] sm:$0xff]
    %v48 = vld [vmem:[%s1 + $0x8] sm:$0xff]
    %v49 = vld [vmem:[%s1 + $0x10] sm:$0xff]
    %v50 = vld [vmem:[%s1 + $0x18] sm:$0xff]
    %v51 = vld [vmem:[%s1 + $0x20] sm:$0xff]
    %v52 = vld [vmem:[%s1 + $0x28] sm:$0xff]
    %v53 = vld [vmem:[%s1 + $0x30] sm:$0xff]
    %v54 = vld [vmem:[%s1 + $0x38] sm:$0xff]
    %v55 = vld [vmem:[%s1 + $0x40] sm:$0xff]
    %v56 = vld [vmem:[%s1 + $0x48] sm:$0xff]
    %v57 = vld [vmem:[%s1 + $0x50] sm:$0xff]
    %v58 = vld [vmem:[%s1 + $0x58] sm:$0xff]
    %v59 = vld [vmem:[%s1 + $0x60] sm:$0xff]
    %v60 = vld [vmem:[%s1 + $0x68] sm:$0xff]
    %v61 = vld [vmem:[%s1 + $0x70] sm:$0xff]
    %v62 = vld [vmem:[%s1 + $0x78] sm:$0xff]
    %v63 = vld [vmem:[%s3] sm:$0x1]
    %v65 = vlaneseq
    %v66 = vshrl.u32 %v65, 7
    %v67 = vsub.s32 0, %v66
    %v68 = vrot.slane %v63, %v67
    %vm70 = vcmask 130048
    %v72 = vsel %vm70, %v43, 0
    %v75 = vsel %vm70, %v44, 0
    %v78 = vsel %vm70, %v45, 0
    %v81 = vsel %vm70, %v46, 0
    %v84 = vsel %vm70, %v47, 0
    %v87 = vsel %vm70, %v48, 0
    %v90 = vsel %vm70, %v49, 0
    %v93 = vsel %vm70, %v50, 0
    %v96 = vsel %vm70, %v51, 0
    %v99 = vsel %vm70, %v52, 0
    %v102 = vsel %vm70, %v53, 0
    %v105 = vsel %vm70, %v54, 0
    %v108 = vsel %vm70, %v55, 0
    %v111 = vsel %vm70, %v56, 0
    %v114 = vsel %vm70, %v57, 0
    %v117 = vsel %vm70, %v58, 0
    %v120 = vsel %vm70, %v59, 0
    %v123 = vsel %vm70, %v60, 0
    %v126 = vsel %vm70, %v61, 0
    %v129 = vsel %vm70, %v62, 0
    %131 = vmatprep.subr.mxu0 0.0
    %132 = vmatpush1.xpose.msra.mxu0 %v129
    %133 = vmatprep.subr.mxu0 0.0
    %134 = vmatpush1.xpose.msra.mxu0 %v126
    %135 = vmatprep.subr.mxu0 0.0
    %136 = vmatpush1.xpose.msra.mxu0 %v123
    %137 = vmatprep.subr.mxu0 0.0
    %138 = vmatpush1.xpose.msra.mxu0 %v120
    %139 = vmatprep.subr.mxu0 0.0
    %140 = vmatpush1.xpose.msra.mxu0 %v117
    %141 = vmatprep.subr.mxu0 0.0
    %142 = vmatpush1.xpose.msra.mxu0 %v114
    %143 = vmatprep.subr.mxu0 0.0
    %144 = vmatpush1.xpose.msra.mxu0 %v111
    %145 = vmatprep.subr.mxu0 0.0
    %146 = vmatpush1.xpose.msra.mxu0 %v108
    %147 = vmatprep.subr.mxu0 0.0
    %148 = vmatpush1.xpose.msra.mxu0 %v105
    %149 = vmatprep.subr.mxu0 0.0
    %150 = vmatpush1.xpose.msra.mxu0 %v102
    %151 = vmatprep.subr.mxu0 0.0
    %152 = vmatpush1.xpose.msra.mxu0 %v99
    %153 = vmatprep.subr.mxu0 0.0
    %154 = vmatpush1.xpose.msra.mxu0 %v96
    %155 = vmatprep.subr.mxu0 0.0
    %156 = vmatpush1.xpose.msra.mxu0 %v93
    %157 = vmatprep.subr.mxu0 0.0
    %158 = vmatpush1.xpose.msra.mxu0 %v90
    %159 = vmatprep.subr.mxu0 0.0
    %160 = vmatpush1.xpose.msra.mxu0 %v87
    %161 = vmatprep.subr.mxu0 0.0
    %162 = vmatpush1.xpose.msra.mxu0 %v84
    %163 = vmatprep.subr.mxu0 0.0
    %164 = vmatpush2.xpose.msra.mxu0 0.0
    %165 = vmatprep.subr.mxu0 0.0
    %166 = vmatpush2.xpose.msra.mxu0 0.0
    %167 = vmatprep.subr.mxu0 0.0
    %168 = vmatpush2.xpose.msra.mxu0 0.0
    %169 = vmatprep.subr.mxu0 0.0
    %170 = vmatpush2.xpose.msra.mxu0 0.0
    %171 = vmatprep.subr.mxu0 0.0
    %172 = vmatpush2.xpose.msra.mxu0 0.0
    %173 = vmatprep.subr.mxu0 0.0
    %174 = vmatpush2.xpose.msra.mxu0 0.0
    %175 = vmatprep.subr.mxu0 0.0
    %176 = vmatpush2.xpose.msra.mxu0 0.0
    %177 = vmatprep.subr.mxu0 0.0
    %178 = vmatpush2.xpose.msra.mxu0 0.0
    %179 = vmatprep.subr.mxu0 0.0
    %180 = vmatpush2.xpose.msra.mxu0 0.0
    %181 = vmatprep.subr.mxu0 0.0
    %182 = vmatpush2.xpose.msra.mxu0 0.0
    %183 = vmatprep.subr.mxu0 0.0
    %184 = vmatpush2.xpose.msra.mxu0 0.0
    %185 = vmatprep.subr.mxu0 0.0
    %186 = vmatpush2.xpose.msra.mxu0 0.0
    %187 = vmatprep.subr.mxu0 0.0
    %188 = vmatpush2.xpose.msra.mxu0 0.0
    %189 = vmatprep.subr.mxu0 0.0
    %190 = vmatpush2.xpose.msra.mxu0 0.0
    %191 = vmatprep.subr.mxu0 0.0
    %192 = vmatpush2.xpose.msra.mxu0 0.0
    %193 = vmatprep.subr.mxu0 0.0
    %194 = vmatpush2.xpose.msra.mxu0 0.0
    %195 = vmatprep.mubr.f32.mxu0 0.0
    %196 = vmatmul.mubr.f32.gmra.mxu0 %v72
    %v197 = vpop.f32.mrf.mxu0
    %v198 = vadd.f32 %v68, %v197
    %v199 = vpop.f32.mrf.mxu0
    %200 = vmatprep.mubr.f32.mxu0 0.0
    %201 = vmatmul.mubr.f32.gmra.mxu0 %v75
    %v202 = vpop.f32.mrf.mxu0
    %v203 = vadd.f32 %v68, %v202
    %v204 = vpop.f32.mrf.mxu0
    %205 = vmatprep.mubr.f32.mxu0 0.0
    %206 = vmatmul.mubr.f32.gmra.mxu0 %v78
    %v207 = vpop.f32.mrf.mxu0
    %v208 = vadd.f32 %v68, %v207
    %v209 = vpop.f32.mrf.mxu0
    %210 = vmatprep.mubr.f32.mxu0 0.0
    %211 = vmatmul.mubr.f32.gmra.mxu0 %v81
    %v212 = vpop.f32.mrf.mxu0
    %v213 = vadd.f32 %v68, %v212
    %v214 = vpop.f32.mrf.mxu0
    %215 = vdwg.mxu0
    %v216 = vld [vmem:[%s4] sm:$0x1]
    %v218 = vlaneseq
    %v219 = vshrl.u32 %v218, 7
    %v220 = vsub.s32 0, %v219
    %v221 = vrot.slane %v216, %v220
    %v223 = vadd.f32 %v198, %v221
    %v224 = vadd.f32 %v203, %v221
    %v225 = vadd.f32 %v208, %v221
    %v226 = vadd.f32 %v213, %v221
    %v227 = vld [vmem:[%s2] sm:$0xff]
    %v228 = vld [vmem:[%s2 + $0x8] sm:$0xff]
    %v229 = vld [vmem:[%s2 + $0x10] sm:$0xff]
    %v230 = vld [vmem:[%s2 + $0x18] sm:$0xff]
    %v231 = vld [vmem:[%s2 + $0x20] sm:$0xff]
    %v232 = vld [vmem:[%s2 + $0x28] sm:$0xff]
    %v233 = vld [vmem:[%s2 + $0x30] sm:$0xff]
    %v234 = vld [vmem:[%s2 + $0x38] sm:$0xff]
    %v235 = vld [vmem:[%s2 + $0x40] sm:$0xff]
    %v236 = vld [vmem:[%s2 + $0x48] sm:$0xff]
    %v237 = vld [vmem:[%s2 + $0x50] sm:$0xff]
    %v238 = vld [vmem:[%s2 + $0x58] sm:$0xff]
    %v239 = vld [vmem:[%s2 + $0x60] sm:$0xff]
    %v240 = vld [vmem:[%s2 + $0x68] sm:$0xff]
    %v241 = vld [vmem:[%s2 + $0x70] sm:$0xff]
    %v242 = vld [vmem:[%s2 + $0x78] sm:$0xff]
    %v243 = vld [vmem:[%s5] sm:$0x1]
    %v245 = vlaneseq
    %v246 = vshrl.u32 %v245, 7
    %v247 = vsub.s32 0, %v246
    %v248 = vrot.slane %v243, %v247
    %v251 = vsel %vm70, %v227, 0
    %v254 = vsel %vm70, %v228, 0
    %v257 = vsel %vm70, %v229, 0
    %v260 = vsel %vm70, %v230, 0
    %v263 = vsel %vm70, %v231, 0
    %v266 = vsel %vm70, %v232, 0
    %v269 = vsel %vm70, %v233, 0
    %v272 = vsel %vm70, %v234, 0
    %v275 = vsel %vm70, %v235, 0
    %v278 = vsel %vm70, %v236, 0
    %v281 = vsel %vm70, %v237, 0
    %v284 = vsel %vm70, %v238, 0
    %v287 = vsel %vm70, %v239, 0
    %v290 = vsel %vm70, %v240, 0
    %v293 = vsel %vm70, %v241, 0
    %v296 = vsel %vm70, %v242, 0
    %298 = vmatprep.subr.mxu0 0.0
    %299 = vmatpush1.xpose.msra.mxu0 %v296
    %300 = vmatprep.subr.mxu0 0.0
    %301 = vmatpush1.xpose.msra.mxu0 %v293
    %302 = vmatprep.subr.mxu0 0.0
    %303 = vmatpush1.xpose.msra.mxu0 %v290
    %304 = vmatprep.subr.mxu0 0.0
    %305 = vmatpush1.xpose.msra.mxu0 %v287
    %306 = vmatprep.subr.mxu0 0.0
    %307 = vmatpush1.xpose.msra.mxu0 %v284
    %308 = vmatprep.subr.mxu0 0.0
    %309 = vmatpush1.xpose.msra.mxu0 %v281
    %310 = vmatprep.subr.mxu0 0.0
    %311 = vmatpush1.xpose.msra.mxu0 %v278
    %312 = vmatprep.subr.mxu0 0.0
    %313 = vmatpush1.xpose.msra.mxu0 %v275
    %314 = vmatprep.subr.mxu0 0.0
    %315 = vmatpush1.xpose.msra.mxu0 %v272
    %316 = vmatprep.subr.mxu0 0.0
    %317 = vmatpush1.xpose.msra.mxu0 %v269
    %318 = vmatprep.subr.mxu0 0.0
    %319 = vmatpush1.xpose.msra.mxu0 %v266
    %320 = vmatprep.subr.mxu0 0.0
    %321 = vmatpush1.xpose.msra.mxu0 %v263
    %322 = vmatprep.subr.mxu0 0.0
    %323 = vmatpush1.xpose.msra.mxu0 %v260
    %324 = vmatprep.subr.mxu0 0.0
    %325 = vmatpush1.xpose.msra.mxu0 %v257
    %326 = vmatprep.subr.mxu0 0.0
    %327 = vmatpush1.xpose.msra.mxu0 %v254
    %328 = vmatprep.subr.mxu0 0.0
    %329 = vmatpush1.xpose.msra.mxu0 %v251
    %330 = vmatprep.subr.mxu0 0.0
    %331 = vmatpush2.xpose.msra.mxu0 0.0
    %332 = vmatprep.subr.mxu0 0.0
    %333 = vmatpush2.xpose.msra.mxu0 0.0
    %334 = vmatprep.subr.mxu0 0.0
    %335 = vmatpush2.xpose.msra.mxu0 0.0
    %336 = vmatprep.subr.mxu0 0.0
    %337 = vmatpush2.xpose.msra.mxu0 0.0
    %338 = vmatprep.subr.mxu0 0.0
    %339 = vmatpush2.xpose.msra.mxu0 0.0
    %340 = vmatprep.subr.mxu0 0.0
    %341 = vmatpush2.xpose.msra.mxu0 0.0
    %342 = vmatprep.subr.mxu0 0.0
    %343 = vmatpush2.xpose.msra.mxu0 0.0
    %344 = vmatprep.subr.mxu0 0.0
    %345 = vmatpush2.xpose.msra.mxu0 0.0
    %346 = vmatprep.subr.mxu0 0.0
    %347 = vmatpush2.xpose.msra.mxu0 0.0
    %348 = vmatprep.subr.mxu0 0.0
    %349 = vmatpush2.xpose.msra.mxu0 0.0
    %350 = vmatprep.subr.mxu0 0.0
    %351 = vmatpush2.xpose.msra.mxu0 0.0
    %352 = vmatprep.subr.mxu0 0.0
    %353 = vmatpush2.xpose.msra.mxu0 0.0
    %354 = vmatprep.subr.mxu0 0.0
    %355 = vmatpush2.xpose.msra.mxu0 0.0
    %356 = vmatprep.subr.mxu0 0.0
    %357 = vmatpush2.xpose.msra.mxu0 0.0
    %358 = vmatprep.subr.mxu0 0.0
    %359 = vmatpush2.xpose.msra.mxu0 0.0
    %360 = vmatprep.subr.mxu0 0.0
    %361 = vmatpush2.xpose.msra.mxu0 0.0
    %362 = vmatprep.mubr.f32.mxu0 0.0
    %363 = vmatmul.mubr.f32.gmra.mxu0 %v72
    %v364 = vpop.f32.mrf.mxu0
    %v365 = vadd.f32 %v248, %v364
    %v366 = vpop.f32.mrf.mxu0
    %367 = vmatprep.mubr.f32.mxu0 0.0
    %368 = vmatmul.mubr.f32.gmra.mxu0 %v75
    %v369 = vpop.f32.mrf.mxu0
    %v370 = vadd.f32 %v248, %v369
    %v371 = vpop.f32.mrf.mxu0
    %372 = vmatprep.mubr.f32.mxu0 0.0
    %373 = vmatmul.mubr.f32.gmra.mxu0 %v78
    %v374 = vpop.f32.mrf.mxu0
    %v375 = vadd.f32 %v248, %v374
    %v376 = vpop.f32.mrf.mxu0
    %377 = vmatprep.mubr.f32.mxu0 0.0
    %378 = vmatmul.mubr.f32.gmra.mxu0 %v81
    %v379 = vpop.f32.mrf.mxu0
    %v380 = vadd.f32 %v248, %v379
    %v381 = vpop.f32.mrf.mxu0
    %382 = vdwg.mxu0
    %v383 = vld [vmem:[%s6] sm:$0x1]
    %v385 = vlaneseq
    %v386 = vshrl.u32 %v385, 7
    %v387 = vsub.s32 0, %v386
    %v388 = vrot.slane %v383, %v387
    %v390 = vadd.f32 %v365, %v388
    %v391 = vadd.f32 %v370, %v388
    %v392 = vadd.f32 %v375, %v388
    %v393 = vadd.f32 %v380, %v388
    %394 = vst [vmem:[#allocation2] sm:$0xf] %v223
    %395 = vst [vmem:[#allocation2] sm:$0xf0] %v393
    %s396 = scalar_lea.vmem [#allocation2], 8
    %397 = vst [vmem:[%s396 - $0x4] sm:$0xf0] %v223
    %398 = vst [vmem:[%s396 + $0x4] sm:$0xf] %v393
    %s399 = scalar_lea.vmem [#allocation2], 16
    %400 = vst [vmem:[%s399] sm:$0xf] %v224
    %401 = vst [vmem:[%s399] sm:$0xf0] %v392
    %s402 = scalar_lea.vmem [#allocation2], 24
    %403 = vst [vmem:[%s402 - $0x4] sm:$0xf0] %v224
    %404 = vst [vmem:[%s402 + $0x4] sm:$0xf] %v392
    %s405 = scalar_lea.vmem [#allocation2], 32
    %406 = vst [vmem:[%s405] sm:$0xf] %v225
    %407 = vst [vmem:[%s405] sm:$0xf0] %v391
    %s408 = scalar_lea.vmem [#allocation2], 40
    %409 = vst [vmem:[%s408 - $0x4] sm:$0xf0] %v225
    %410 = vst [vmem:[%s408 + $0x4] sm:$0xf] %v391
    %s411 = scalar_lea.vmem [#allocation2], 48
    %412 = vst [vmem:[%s411] sm:$0xf] %v226
    %413 = vst [vmem:[%s411] sm:$0xf0] %v390
    %s414 = scalar_lea.vmem [#allocation2], 56
    %415 = vst [vmem:[%s414 - $0x4] sm:$0xf0] %v226
    %416 = vst [vmem:[%s414 + $0x4] sm:$0xf] %v390
    %v417 = vld [vmem:[%s7] sm:$0xff]
    %v418 = vld [vmem:[%s7 + $0x8] sm:$0xff]
    %v419 = vld [vmem:[%s7 + $0x10] sm:$0xff]
    %v420 = vld [vmem:[%s7 + $0x18] sm:$0xff]
    %v421 = vld [vmem:[%s7 + $0x20] sm:$0xff]
    %v422 = vld [vmem:[%s7 + $0x28] sm:$0xff]
    %v423 = vld [vmem:[%s7 + $0x30] sm:$0xff]
    %v424 = vld [vmem:[%s7 + $0x38] sm:$0xff]
    %v425 = vld [vmem:[%s7 + $0x40] sm:$0xff]
    %v426 = vld [vmem:[%s7 + $0x48] sm:$0xff]
    %v427 = vld [vmem:[%s7 + $0x50] sm:$0xff]
    %v428 = vld [vmem:[%s7 + $0x58] sm:$0xff]
    %v429 = vld [vmem:[%s7 + $0x60] sm:$0xff]
    %v430 = vld [vmem:[%s7 + $0x68] sm:$0xff]
    %v431 = vld [vmem:[%s7 + $0x70] sm:$0xff]
    %v432 = vld [vmem:[%s7 + $0x78] sm:$0xff]
    %vm433 = vcmask 261120
    %434 = vst.msk [vmem:[#allocation3] sm:$0xff] %vm433, %v417
    %435 = vst.msk [vmem:[#allocation3 + $0x8] sm:$0xff] %vm433, %v418
    %436 = vst.msk [vmem:[#allocation3 + $0x10] sm:$0xff] %vm433, %v419
    %437 = vst.msk [vmem:[#allocation3 + $0x18] sm:$0xff] %vm433, %v420
    %438 = vst.msk [vmem:[#allocation3 + $0x20] sm:$0xff] %vm433, %v421
    %439 = vst.msk [vmem:[#allocation3 + $0x28] sm:$0xff] %vm433, %v422
    %440 = vst.msk [vmem:[#allocation3 + $0x30] sm:$0xff] %vm433, %v423
    %441 = vst.msk [vmem:[#allocation3 + $0x38] sm:$0xff] %vm433, %v424
    %442 = vst.msk [vmem:[#allocation3 + $0x40] sm:$0xff] %vm433, %v425
    %443 = vst.msk [vmem:[#allocation3 + $0x48] sm:$0xff] %vm433, %v426
    %444 = vst.msk [vmem:[#allocation3 + $0x50] sm:$0xff] %vm433, %v427
    %445 = vst.msk [vmem:[#allocation3 + $0x58] sm:$0xff] %vm433, %v428
    %446 = vst.msk [vmem:[#allocation3 + $0x60] sm:$0xff] %vm433, %v429
    %447 = vst.msk [vmem:[#allocation3 + $0x68] sm:$0xff] %vm433, %v430
    %448 = vst.msk [vmem:[#allocation3 + $0x70] sm:$0xff] %vm433, %v431
    %449 = vst.msk [vmem:[#allocation3 + $0x78] sm:$0xff] %vm433, %v432
    %v450 = vld [vmem:[%s8] sm:$0xff]
    %v451 = vld [vmem:[%s8 + $0x8] sm:$0xff]
    %v452 = vld [vmem:[%s8 + $0x10] sm:$0xff]
    %v453 = vld [vmem:[%s8 + $0x18] sm:$0xff]
    %v454 = vld [vmem:[%s8 + $0x20] sm:$0xff]
    %v455 = vld [vmem:[%s8 + $0x28] sm:$0xff]
    %v456 = vld [vmem:[%s8 + $0x30] sm:$0xff]
    %v457 = vld [vmem:[%s8 + $0x38] sm:$0xff]
    %v458 = vld [vmem:[%s8 + $0x40] sm:$0xff]
    %v459 = vld [vmem:[%s8 + $0x48] sm:$0xff]
    %v460 = vld [vmem:[%s8 + $0x50] sm:$0xff]
    %v461 = vld [vmem:[%s8 + $0x58] sm:$0xff]
    %v462 = vld [vmem:[%s8 + $0x60] sm:$0xff]
    %v463 = vld [vmem:[%s8 + $0x68] sm:$0xff]
    %v464 = vld [vmem:[%s8 + $0x70] sm:$0xff]
    %v465 = vld [vmem:[%s8 + $0x78] sm:$0xff]
    %466 = vst.msk [vmem:[#allocation3 + $0x80] sm:$0xff] %vm433, %v450
    %467 = vst.msk [vmem:[#allocation3 + $0x88] sm:$0xff] %vm433, %v451
    %468 = vst.msk [vmem:[#allocation3 + $0x90] sm:$0xff] %vm433, %v452
    %469 = vst.msk [vmem:[#allocation3 + $0x98] sm:$0xff] %vm433, %v453
    %470 = vst.msk [vmem:[#allocation3 + $0xa0] sm:$0xff] %vm433, %v454
    %471 = vst.msk [vmem:[#allocation3 + $0xa8] sm:$0xff] %vm433, %v455
    %472 = vst.msk [vmem:[#allocation3 + $0xb0] sm:$0xff] %vm433, %v456
    %473 = vst.msk [vmem:[#allocation3 + $0xb8] sm:$0xff] %vm433, %v457
    %474 = vst.msk [vmem:[#allocation3 + $0xc0] sm:$0xff] %vm433, %v458
    %475 = vst.msk [vmem:[#allocation3 + $0xc8] sm:$0xff] %vm433, %v459
    %476 = vst.msk [vmem:[#allocation3 + $0xd0] sm:$0xff] %vm433, %v460
    %477 = vst.msk [vmem:[#allocation3 + $0xd8] sm:$0xff] %vm433, %v461
    %478 = vst.msk [vmem:[#allocation3 + $0xe0] sm:$0xff] %vm433, %v462
    %479 = vst.msk [vmem:[#allocation3 + $0xe8] sm:$0xff] %vm433, %v463
    %480 = vst.msk [vmem:[#allocation3 + $0xf0] sm:$0xff] %vm433, %v464
    %481 = vst.msk [vmem:[#allocation3 + $0xf8] sm:$0xff] %vm433, %v465
    %v482 = vld [vmem:[#allocation3] sm:$0xff]
    %v483 = vld [vmem:[#allocation3 + $0x8] sm:$0xff]
    %v484 = vld [vmem:[#allocation3 + $0x10] sm:$0xff]
    %v485 = vld [vmem:[#allocation3 + $0x18] sm:$0xff]
    %v486 = vld [vmem:[#allocation3 + $0x20] sm:$0xff]
    %v487 = vld [vmem:[#allocation3 + $0x28] sm:$0xff]
    %v488 = vld [vmem:[#allocation3 + $0x30] sm:$0xff]
    %v489 = vld [vmem:[#allocation3 + $0x38] sm:$0xff]
    %v490 = vld [vmem:[#allocation3 + $0x40] sm:$0xff]
    %v491 = vld [vmem:[#allocation3 + $0x48] sm:$0xff]
    %v492 = vld [vmem:[#allocation3 + $0x50] sm:$0xff]
    %v493 = vld [vmem:[#allocation3 + $0x58] sm:$0xff]
    %v494 = vld [vmem:[#allocation3 + $0x60] sm:$0xff]
    %v495 = vld [vmem:[#allocation3 + $0x68] sm:$0xff]
    %v496 = vld [vmem:[#allocation3 + $0x70] sm:$0xff]
    %v497 = vld [vmem:[#allocation3 + $0x78] sm:$0xff]
    %v498 = vld [vmem:[#allocation3 + $0x80] sm:$0xff]
    %v499 = vld [vmem:[#allocation3 + $0x88] sm:$0xff]
    %v500 = vld [vmem:[#allocation3 + $0x90] sm:$0xff]
    %v501 = vld [vmem:[#allocation3 + $0x98] sm:$0xff]
    %v502 = vld [vmem:[#allocation3 + $0xa0] sm:$0xff]
    %v503 = vld [vmem:[#allocation3 + $0xa8] sm:$0xff]
    %v504 = vld [vmem:[#allocation3 + $0xb0] sm:$0xff]
    %v505 = vld [vmem:[#allocation3 + $0xb8] sm:$0xff]
    %v506 = vld [vmem:[#allocation3 + $0xc0] sm:$0xff]
    %v507 = vld [vmem:[#allocation3 + $0xc8] sm:$0xff]
    %v508 = vld [vmem:[#allocation3 + $0xd0] sm:$0xff]
    %v509 = vld [vmem:[#allocation3 + $0xd8] sm:$0xff]
    %v510 = vld [vmem:[#allocation3 + $0xe0] sm:$0xff]
    %v511 = vld [vmem:[#allocation3 + $0xe8] sm:$0xff]
    %v512 = vld [vmem:[#allocation3 + $0xf0] sm:$0xff]
    %v513 = vld [vmem:[#allocation3 + $0xf8] sm:$0xff]
    %v514 = vlaneseq
    %v515 = vshrl.u32 %v514, 7
    %vm516 = vcmp.lt.s32.totalorder %v515, 4
    %v517 = vld [vmem:[%s9] sm:$0xff]
    %v518 = vld [vmem:[%s10] sm:$0xff]
    %v519 = vld [vmem:[#allocation2] sm:$0xff]
    %v521 = vsel %vm433, %v517, 0
    %v524 = vsel %vm433, %v482, 0
    %v527 = vsel %vm433, %v483, 0
    %v530 = vsel %vm433, %v484, 0
    %v533 = vsel %vm433, %v485, 0
    %v536 = vsel %vm433, %v486, 0
    %v539 = vsel %vm433, %v487, 0
    %v542 = vsel %vm433, %v488, 0
    %v545 = vsel %vm433, %v489, 0
    %v548 = vsel %vm433, %v490, 0
    %v551 = vsel %vm433, %v491, 0
    %v554 = vsel %vm433, %v492, 0
    %v557 = vsel %vm433, %v493, 0
    %v560 = vsel %vm433, %v494, 0
    %v563 = vsel %vm433, %v495, 0
    %v566 = vsel %vm433, %v496, 0
    %v569 = vsel %vm433, %v497, 0
    %v572 = vsel %vm433, %v498, 0
    %v575 = vsel %vm433, %v499, 0
    %v578 = vsel %vm433, %v500, 0
    %v581 = vsel %vm433, %v501, 0
    %v584 = vsel %vm433, %v502, 0
    %v587 = vsel %vm433, %v503, 0
    %v590 = vsel %vm433, %v504, 0
    %v593 = vsel %vm433, %v505, 0
    %v596 = vsel %vm433, %v506, 0
    %v599 = vsel %vm433, %v507, 0
    %v602 = vsel %vm433, %v508, 0
    %v605 = vsel %vm433, %v509, 0
    %v608 = vsel %vm433, %v510, 0
    %v611 = vsel %vm433, %v511, 0
    %v614 = vsel %vm433, %v512, 0
    %v617 = vsel %vm433, %v513, 0
    %619 = vmatprep.subr.mxu0 0.0
    %620 = vmatpush1.xpose.msra.mxu0 %v569
    %621 = vmatprep.subr.mxu0 0.0
    %622 = vmatpush1.xpose.msra.mxu0 %v566
    %623 = vmatprep.subr.mxu0 0.0
    %624 = vmatpush1.xpose.msra.mxu0 %v563
    %625 = vmatprep.subr.mxu0 0.0
    %626 = vmatpush1.xpose.msra.mxu0 %v560
    %627 = vmatprep.subr.mxu0 0.0
    %628 = vmatpush1.xpose.msra.mxu0 %v557
    %629 = vmatprep.subr.mxu0 0.0
    %630 = vmatpush1.xpose.msra.mxu0 %v554
    %631 = vmatprep.subr.mxu0 0.0
    %632 = vmatpush1.xpose.msra.mxu0 %v551
    %633 = vmatprep.subr.mxu0 0.0
    %634 = vmatpush1.xpose.msra.mxu0 %v548
    %635 = vmatprep.subr.mxu0 0.0
    %636 = vmatpush1.xpose.msra.mxu0 %v545
    %637 = vmatprep.subr.mxu0 0.0
    %638 = vmatpush1.xpose.msra.mxu0 %v542
    %639 = vmatprep.subr.mxu0 0.0
    %640 = vmatpush1.xpose.msra.mxu0 %v539
    %641 = vmatprep.subr.mxu0 0.0
    %642 = vmatpush1.xpose.msra.mxu0 %v536
    %643 = vmatprep.subr.mxu0 0.0
    %644 = vmatpush1.xpose.msra.mxu0 %v533
    %645 = vmatprep.subr.mxu0 0.0
    %646 = vmatpush1.xpose.msra.mxu0 %v530
    %647 = vmatprep.subr.mxu0 0.0
    %648 = vmatpush1.xpose.msra.mxu0 %v527
    %649 = vmatprep.subr.mxu0 0.0
    %650 = vmatpush1.xpose.msra.mxu0 %v524
    %651 = vmatprep.subr.mxu0 0.0
    %652 = vmatpush2.xpose.msra.mxu0 %v617
    %653 = vmatprep.subr.mxu0 0.0
    %654 = vmatpush2.xpose.msra.mxu0 %v614
    %655 = vmatprep.subr.mxu0 0.0
    %656 = vmatpush2.xpose.msra.mxu0 %v611
    %657 = vmatprep.subr.mxu0 0.0
    %658 = vmatpush2.xpose.msra.mxu0 %v608
    %659 = vmatprep.subr.mxu0 0.0
    %660 = vmatpush2.xpose.msra.mxu0 %v605
    %661 = vmatprep.subr.mxu0 0.0
    %662 = vmatpush2.xpose.msra.mxu0 %v602
    %663 = vmatprep.subr.mxu0 0.0
    %664 = vmatpush2.xpose.msra.mxu0 %v599
    %665 = vmatprep.subr.mxu0 0.0
    %666 = vmatpush2.xpose.msra.mxu0 %v596
    %667 = vmatprep.subr.mxu0 0.0
    %668 = vmatpush2.xpose.msra.mxu0 %v593
    %669 = vmatprep.subr.mxu0 0.0
    %670 = vmatpush2.xpose.msra.mxu0 %v590
    %671 = vmatprep.subr.mxu0 0.0
    %672 = vmatpush2.xpose.msra.mxu0 %v587
    %673 = vmatprep.subr.mxu0 0.0
    %674 = vmatpush2.xpose.msra.mxu0 %v584
    %675 = vmatprep.subr.mxu0 0.0
    %676 = vmatpush2.xpose.msra.mxu0 %v581
    %677 = vmatprep.subr.mxu0 0.0
    %678 = vmatpush2.xpose.msra.mxu0 %v578
    %679 = vmatprep.subr.mxu0 0.0
    %680 = vmatpush2.xpose.msra.mxu0 %v575
    %681 = vmatprep.subr.mxu0 0.0
    %682 = vmatpush2.xpose.msra.mxu0 %v572
    %683 = vmatprep.mubr.f32.mxu0 0.0
    %684 = vmatmul.mubr.f32.gmra.mxu0 %v521
    %v685 = vpop.f32.mrf.mxu0
    %v686 = vadd.f32 0.0, %v685
    %v687 = vpop.f32.mrf.mxu0
    %v688 = vadd.f32 0.0, %v687
    %689 = vdwg.mxu0
    %v690 = vsel %vm516, %v686, %v688
    %v691 = vadd.f32 %v519, %v690
    %v692 = vxor.u32 %v691, 2147483648
    %v693 = vmul.f32 %v692, 1.442695
    %v694 = vpow.pop %v693
    %v695 = vadd.f32 %v694, 1.0
    %v696 = vrcp.pop %v695
    %v697 = vmul.f32 1.0, %v696
    %v698 = vtanh.pop %v691
    %700 = vrot.lane.b32.xlu0 %v518, 32
    %v701 = vpop.permute.xlu0 %700
    %v703 = vmul.f32 %v697, %v701
    %705 = vrot.lane.b32.xlu0 %v698, 64
    %v706 = vpop.permute.xlu0 %705
    %v708 = vmul.f32 %v697, %v706
    %710 = vrot.lane.b32.xlu0 %v708, 32
    %v711 = vpop.permute.xlu0 %710
    %v713 = vadd.f32 %v703, %v711
    %v714 = vtanh.pop %v713
    %716 = vrot.lane.b32.xlu0 %v714, 64
    %v717 = vpop.permute.xlu0 %716
    %v719 = vmul.f32 %v697, %v717
    %721 = vrot.lane.b32.xlu0 %v719, 32
    %v722 = vpop.permute.xlu0 %721
    %724 = vst.msk [vmem:[#allocation4] sm:$0xff] %vm433, %v722
    %v725 = vld [vmem:[%s396] sm:$0xff]
    %v726 = vsel %vm433, %v722, 0
    %728 = vmatprep.subr.mxu0 0.0
    %729 = vmatpush1.xpose.msra.mxu0 %v569
    %730 = vmatprep.subr.mxu0 0.0
    %731 = vmatpush1.xpose.msra.mxu0 %v566
    %732 = vmatprep.subr.mxu0 0.0
    %733 = vmatpush1.xpose.msra.mxu0 %v563
    %734 = vmatprep.subr.mxu0 0.0
    %735 = vmatpush1.xpose.msra.mxu0 %v560
    %736 = vmatprep.subr.mxu0 0.0
    %737 = vmatpush1.xpose.msra.mxu0 %v557
    %738 = vmatprep.subr.mxu0 0.0
    %739 = vmatpush1.xpose.msra.mxu0 %v554
    %740 = vmatprep.subr.mxu0 0.0
    %741 = vmatpush1.xpose.msra.mxu0 %v551
    %742 = vmatprep.subr.mxu0 0.0
    %743 = vmatpush1.xpose.msra.mxu0 %v548
    %744 = vmatprep.subr.mxu0 0.0
    %745 = vmatpush1.xpose.msra.mxu0 %v545
    %746 = vmatprep.subr.mxu0 0.0
    %747 = vmatpush1.xpose.msra.mxu0 %v542
    %748 = vmatprep.subr.mxu0 0.0
    %749 = vmatpush1.xpose.msra.mxu0 %v539
    %750 = vmatprep.subr.mxu0 0.0
    %751 = vmatpush1.xpose.msra.mxu0 %v536
    %752 = vmatprep.subr.mxu0 0.0
    %753 = vmatpush1.xpose.msra.mxu0 %v533
    %754 = vmatprep.subr.mxu0 0.0
    %755 = vmatpush1.xpose.msra.mxu0 %v530
    %756 = vmatprep.subr.mxu0 0.0
    %757 = vmatpush1.xpose.msra.mxu0 %v527
    %758 = vmatprep.subr.mxu0 0.0
    %759 = vmatpush1.xpose.msra.mxu0 %v524
    %760 = vmatprep.subr.mxu0 0.0
    %761 = vmatpush2.xpose.msra.mxu0 %v617
    %762 = vmatprep.subr.mxu0 0.0
    %763 = vmatpush2.xpose.msra.mxu0 %v614
    %764 = vmatprep.subr.mxu0 0.0
    %765 = vmatpush2.xpose.msra.mxu0 %v611
    %766 = vmatprep.subr.mxu0 0.0
    %767 = vmatpush2.xpose.msra.mxu0 %v608
    %768 = vmatprep.subr.mxu0 0.0
    %769 = vmatpush2.xpose.msra.mxu0 %v605
    %770 = vmatprep.subr.mxu0 0.0
    %771 = vmatpush2.xpose.msra.mxu0 %v602
    %772 = vmatprep.subr.mxu0 0.0
    %773 = vmatpush2.xpose.msra.mxu0 %v599
    %774 = vmatprep.subr.mxu0 0.0
    %775 = vmatpush2.xpose.msra.mxu0 %v596
    %776 = vmatprep.subr.mxu0 0.0
    %777 = vmatpush2.xpose.msra.mxu0 %v593
    %778 = vmatprep.subr.mxu0 0.0
    %779 = vmatpush2.xpose.msra.mxu0 %v590
    %780 = vmatprep.subr.mxu0 0.0
    %781 = vmatpush2.xpose.msra.mxu0 %v587
    %782 = vmatprep.subr.mxu0 0.0
    %783 = vmatpush2.xpose.msra.mxu0 %v584
    %784 = vmatprep.subr.mxu0 0.0
    %785 = vmatpush2.xpose.msra.mxu0 %v581
    %786 = vmatprep.subr.mxu0 0.0
    %787 = vmatpush2.xpose.msra.mxu0 %v578
    %788 = vmatprep.subr.mxu0 0.0
    %789 = vmatpush2.xpose.msra.mxu0 %v575
    %790 = vmatprep.subr.mxu0 0.0
    %791 = vmatpush2.xpose.msra.mxu0 %v572
    %792 = vmatprep.mubr.f32.mxu0 0.0
    %793 = vmatmul.mubr.f32.gmra.mxu0 %v726
    %v794 = vpop.f32.mrf.mxu0
    %v795 = vadd.f32 0.0, %v794
    %v796 = vpop.f32.mrf.mxu0
    %v797 = vadd.f32 0.0, %v796
    %798 = vdwg.mxu0
    %v799 = vsel %vm516, %v795, %v797
    %v800 = vadd.f32 %v725, %v799
    %v801 = vxor.u32 %v800, 2147483648
    %v802 = vmul.f32 %v801, 1.442695
    %v803 = vpow.pop %v802
    %v804 = vadd.f32 %v803, 1.0
    %v805 = vrcp.pop %v804
    %v806 = vmul.f32 1.0, %v805
    %v807 = vtanh.pop %v800
    %v808 = vmul.f32 %v806, %v713
    %810 = vrot.lane.b32.xlu0 %v807, 64
    %v811 = vpop.permute.xlu0 %810
    %v813 = vmul.f32 %v806, %v811
    %815 = vrot.lane.b32.xlu0 %v813, 32
    %v816 = vpop.permute.xlu0 %815
    %v818 = vadd.f32 %v808, %v816
    %v819 = vtanh.pop %v818
    %821 = vrot.lane.b32.xlu0 %v819, 64
    %v822 = vpop.permute.xlu0 %821
    %v824 = vmul.f32 %v806, %v822
    %826 = vrot.lane.b32.xlu0 %v824, 32
    %v827 = vpop.permute.xlu0 %826
    %s829 = scalar_lea.vmem [#allocation4], 8
    %830 = vst.msk [vmem:[%s829] sm:$0xff] %vm433, %v827
    %v831 = vld [vmem:[%s399] sm:$0xff]
    %v832 = vsel %vm433, %v827, 0
    %834 = vmatprep.subr.mxu0 0.0
    %835 = vmatpush1.xpose.msra.mxu0 %v569
    %836 = vmatprep.subr.mxu0 0.0
    %837 = vmatpush1.xpose.msra.mxu0 %v566
    %838 = vmatprep.subr.mxu0 0.0
    %839 = vmatpush1.xpose.msra.mxu0 %v563
    %840 = vmatprep.subr.mxu0 0.0
    %841 = vmatpush1.xpose.msra.mxu0 %v560
    %842 = vmatprep.subr.mxu0 0.0
    %843 = vmatpush1.xpose.msra.mxu0 %v557
    %844 = vmatprep.subr.mxu0 0.0
    %845 = vmatpush1.xpose.msra.mxu0 %v554
    %846 = vmatprep.subr.mxu0 0.0
    %847 = vmatpush1.xpose.msra.mxu0 %v551
    %848 = vmatprep.subr.mxu0 0.0
    %849 = vmatpush1.xpose.msra.mxu0 %v548
    %850 = vmatprep.subr.mxu0 0.0
    %851 = vmatpush1.xpose.msra.mxu0 %v545
    %852 = vmatprep.subr.mxu0 0.0
    %853 = vmatpush1.xpose.msra.mxu0 %v542
    %854 = vmatprep.subr.mxu0 0.0
    %855 = vmatpush1.xpose.msra.mxu0 %v539
    %856 = vmatprep.subr.mxu0 0.0
    %857 = vmatpush1.xpose.msra.mxu0 %v536
    %858 = vmatprep.subr.mxu0 0.0
    %859 = vmatpush1.xpose.msra.mxu0 %v533
    %860 = vmatprep.subr.mxu0 0.0
    %861 = vmatpush1.xpose.msra.mxu0 %v530
    %862 = vmatprep.subr.mxu0 0.0
    %863 = vmatpush1.xpose.msra.mxu0 %v527
    %864 = vmatprep.subr.mxu0 0.0
    %865 = vmatpush1.xpose.msra.mxu0 %v524
    %866 = vmatprep.subr.mxu0 0.0
    %867 = vmatpush2.xpose.msra.mxu0 %v617
    %868 = vmatprep.subr.mxu0 0.0
    %869 = vmatpush2.xpose.msra.mxu0 %v614
    %870 = vmatprep.subr.mxu0 0.0
    %871 = vmatpush2.xpose.msra.mxu0 %v611
    %872 = vmatprep.subr.mxu0 0.0
    %873 = vmatpush2.xpose.msra.mxu0 %v608
    %874 = vmatprep.subr.mxu0 0.0
    %875 = vmatpush2.xpose.msra.mxu0 %v605
    %876 = vmatprep.subr.mxu0 0.0
    %877 = vmatpush2.xpose.msra.mxu0 %v602
    %878 = vmatprep.subr.mxu0 0.0
    %879 = vmatpush2.xpose.msra.mxu0 %v599
    %880 = vmatprep.subr.mxu0 0.0
    %881 = vmatpush2.xpose.msra.mxu0 %v596
    %882 = vmatprep.subr.mxu0 0.0
    %883 = vmatpush2.xpose.msra.mxu0 %v593
    %884 = vmatprep.subr.mxu0 0.0
    %885 = vmatpush2.xpose.msra.mxu0 %v590
    %886 = vmatprep.subr.mxu0 0.0
    %887 = vmatpush2.xpose.msra.mxu0 %v587
    %888 = vmatprep.subr.mxu0 0.0
    %889 = vmatpush2.xpose.msra.mxu0 %v584
    %890 = vmatprep.subr.mxu0 0.0
    %891 = vmatpush2.xpose.msra.mxu0 %v581
    %892 = vmatprep.subr.mxu0 0.0
    %893 = vmatpush2.xpose.msra.mxu0 %v578
    %894 = vmatprep.subr.mxu0 0.0
    %895 = vmatpush2.xpose.msra.mxu0 %v575
    %896 = vmatprep.subr.mxu0 0.0
    %897 = vmatpush2.xpose.msra.mxu0 %v572
    %898 = vmatprep.mubr.f32.mxu0 0.0
    %899 = vmatmul.mubr.f32.gmra.mxu0 %v832
    %v900 = vpop.f32.mrf.mxu0
    %v901 = vadd.f32 0.0, %v900
    %v902 = vpop.f32.mrf.mxu0
    %v903 = vadd.f32 0.0, %v902
    %904 = vdwg.mxu0
    %v905 = vsel %vm516, %v901, %v903
    %v906 = vadd.f32 %v831, %v905
    %v907 = vxor.u32 %v906, 2147483648
    %v908 = vmul.f32 %v907, 1.442695
    %v909 = vpow.pop %v908
    %v910 = vadd.f32 %v909, 1.0
    %v911 = vrcp.pop %v910
    %v912 = vmul.f32 1.0, %v911
    %v913 = vtanh.pop %v906
    %v914 = vmul.f32 %v912, %v818
    %916 = vrot.lane.b32.xlu0 %v913, 64
    %v917 = vpop.permute.xlu0 %916
    %v919 = vmul.f32 %v912, %v917
    %921 = vrot.lane.b32.xlu0 %v919, 32
    %v922 = vpop.permute.xlu0 %921
    %v924 = vadd.f32 %v914, %v922
    %v925 = vtanh.pop %v924
    %927 = vrot.lane.b32.xlu0 %v925, 64
    %v928 = vpop.permute.xlu0 %927
    %v930 = vmul.f32 %v912, %v928
    %932 = vrot.lane.b32.xlu0 %v930, 32
    %v933 = vpop.permute.xlu0 %932
    %s935 = scalar_lea.vmem [#allocation4], 16
    %936 = vst.msk [vmem:[%s935] sm:$0xff] %vm433, %v933
    %v937 = vld [vmem:[%s402] sm:$0xff]
    %v938 = vsel %vm433, %v933, 0
    %940 = vmatprep.subr.mxu0 0.0
    %941 = vmatpush1.xpose.msra.mxu0 %v569
    %942 = vmatprep.subr.mxu0 0.0
    %943 = vmatpush1.xpose.msra.mxu0 %v566
    %944 = vmatprep.subr.mxu0 0.0
    %945 = vmatpush1.xpose.msra.mxu0 %v563
    %946 = vmatprep.subr.mxu0 0.0
    %947 = vmatpush1.xpose.msra.mxu0 %v560
    %948 = vmatprep.subr.mxu0 0.0
    %949 = vmatpush1.xpose.msra.mxu0 %v557
    %950 = vmatprep.subr.mxu0 0.0
    %951 = vmatpush1.xpose.msra.mxu0 %v554
    %952 = vmatprep.subr.mxu0 0.0
    %953 = vmatpush1.xpose.msra.mxu0 %v551
    %954 = vmatprep.subr.mxu0 0.0
    %955 = vmatpush1.xpose.msra.mxu0 %v548
    %956 = vmatprep.subr.mxu0 0.0
    %957 = vmatpush1.xpose.msra.mxu0 %v545
    %958 = vmatprep.subr.mxu0 0.0
    %959 = vmatpush1.xpose.msra.mxu0 %v542
    %960 = vmatprep.subr.mxu0 0.0
    %961 = vmatpush1.xpose.msra.mxu0 %v539
    %962 = vmatprep.subr.mxu0 0.0
    %963 = vmatpush1.xpose.msra.mxu0 %v536
    %964 = vmatprep.subr.mxu0 0.0
    %965 = vmatpush1.xpose.msra.mxu0 %v533
    %966 = vmatprep.subr.mxu0 0.0
    %967 = vmatpush1.xpose.msra.mxu0 %v530
    %968 = vmatprep.subr.mxu0 0.0
    %969 = vmatpush1.xpose.msra.mxu0 %v527
    %970 = vmatprep.subr.mxu0 0.0
    %971 = vmatpush1.xpose.msra.mxu0 %v524
    %972 = vmatprep.subr.mxu0 0.0
    %973 = vmatpush2.xpose.msra.mxu0 %v617
    %974 = vmatprep.subr.mxu0 0.0
    %975 = vmatpush2.xpose.msra.mxu0 %v614
    %976 = vmatprep.subr.mxu0 0.0
    %977 = vmatpush2.xpose.msra.mxu0 %v611
    %978 = vmatprep.subr.mxu0 0.0
    %979 = vmatpush2.xpose.msra.mxu0 %v608
    %980 = vmatprep.subr.mxu0 0.0
    %981 = vmatpush2.xpose.msra.mxu0 %v605
    %982 = vmatprep.subr.mxu0 0.0
    %983 = vmatpush2.xpose.msra.mxu0 %v602
    %984 = vmatprep.subr.mxu0 0.0
    %985 = vmatpush2.xpose.msra.mxu0 %v599
    %986 = vmatprep.subr.mxu0 0.0
    %987 = vmatpush2.xpose.msra.mxu0 %v596
    %988 = vmatprep.subr.mxu0 0.0
    %989 = vmatpush2.xpose.msra.mxu0 %v593
    %990 = vmatprep.subr.mxu0 0.0
    %991 = vmatpush2.xpose.msra.mxu0 %v590
    %992 = vmatprep.subr.mxu0 0.0
    %993 = vmatpush2.xpose.msra.mxu0 %v587
    %994 = vmatprep.subr.mxu0 0.0
    %995 = vmatpush2.xpose.msra.mxu0 %v584
    %996 = vmatprep.subr.mxu0 0.0
    %997 = vmatpush2.xpose.msra.mxu0 %v581
    %998 = vmatprep.subr.mxu0 0.0
    %999 = vmatpush2.xpose.msra.mxu0 %v578
    %1000 = vmatprep.subr.mxu0 0.0
    %1001 = vmatpush2.xpose.msra.mxu0 %v575
    %1002 = vmatprep.subr.mxu0 0.0
    %1003 = vmatpush2.xpose.msra.mxu0 %v572
    %1004 = vmatprep.mubr.f32.mxu0 0.0
    %1005 = vmatmul.mubr.f32.gmra.mxu0 %v938
    %v1006 = vpop.f32.mrf.mxu0
    %v1007 = vadd.f32 0.0, %v1006
    %v1008 = vpop.f32.mrf.mxu0
    %v1009 = vadd.f32 0.0, %v1008
    %1010 = vdwg.mxu0
    %v1011 = vsel %vm516, %v1007, %v1009
    %v1012 = vadd.f32 %v937, %v1011
    %v1013 = vxor.u32 %v1012, 2147483648
    %v1014 = vmul.f32 %v1013, 1.442695
    %v1015 = vpow.pop %v1014
    %v1016 = vadd.f32 %v1015, 1.0
    %v1017 = vrcp.pop %v1016
    %v1018 = vmul.f32 1.0, %v1017
    %v1019 = vtanh.pop %v1012
    %v1020 = vmul.f32 %v1018, %v924
    %1022 = vrot.lane.b32.xlu0 %v1019, 64
    %v1023 = vpop.permute.xlu0 %1022
    %v1025 = vmul.f32 %v1018, %v1023
    %1027 = vrot.lane.b32.xlu0 %v1025, 32
    %v1028 = vpop.permute.xlu0 %1027
    %v1030 = vadd.f32 %v1020, %v1028
    %v1031 = vtanh.pop %v1030
    %1033 = vrot.lane.b32.xlu0 %v1031, 64
    %v1034 = vpop.permute.xlu0 %1033
    %v1036 = vmul.f32 %v1018, %v1034
    %1038 = vrot.lane.b32.xlu0 %v1036, 32
    %v1039 = vpop.permute.xlu0 %1038
    %s1041 = scalar_lea.vmem [#allocation4], 24
    %1042 = vst.msk [vmem:[%s1041] sm:$0xff] %vm433, %v1039
    %v1043 = vld [vmem:[%s405] sm:$0xff]
    %v1044 = vsel %vm433, %v1039, 0
    %1046 = vmatprep.subr.mxu0 0.0
    %1047 = vmatpush1.xpose.msra.mxu0 %v569
    %1048 = vmatprep.subr.mxu0 0.0
    %1049 = vmatpush1.xpose.msra.mxu0 %v566
    %1050 = vmatprep.subr.mxu0 0.0
    %1051 = vmatpush1.xpose.msra.mxu0 %v563
    %1052 = vmatprep.subr.mxu0 0.0
    %1053 = vmatpush1.xpose.msra.mxu0 %v560
    %1054 = vmatprep.subr.mxu0 0.0
    %1055 = vmatpush1.xpose.msra.mxu0 %v557
    %1056 = vmatprep.subr.mxu0 0.0
    %1057 = vmatpush1.xpose.msra.mxu0 %v554
    %1058 = vmatprep.subr.mxu0 0.0
    %1059 = vmatpush1.xpose.msra.mxu0 %v551
    %1060 = vmatprep.subr.mxu0 0.0
    %1061 = vmatpush1.xpose.msra.mxu0 %v548
    %1062 = vmatprep.subr.mxu0 0.0
    %1063 = vmatpush1.xpose.msra.mxu0 %v545
    %1064 = vmatprep.subr.mxu0 0.0
    %1065 = vmatpush1.xpose.msra.mxu0 %v542
    %1066 = vmatprep.subr.mxu0 0.0
    %1067 = vmatpush1.xpose.msra.mxu0 %v539
    %1068 = vmatprep.subr.mxu0 0.0
    %1069 = vmatpush1.xpose.msra.mxu0 %v536
    %1070 = vmatprep.subr.mxu0 0.0
    %1071 = vmatpush1.xpose.msra.mxu0 %v533
    %1072 = vmatprep.subr.mxu0 0.0
    %1073 = vmatpush1.xpose.msra.mxu0 %v530
    %1074 = vmatprep.subr.mxu0 0.0
    %1075 = vmatpush1.xpose.msra.mxu0 %v527
    %1076 = vmatprep.subr.mxu0 0.0
    %1077 = vmatpush1.xpose.msra.mxu0 %v524
    %1078 = vmatprep.subr.mxu0 0.0
    %1079 = vmatpush2.xpose.msra.mxu0 %v617
    %1080 = vmatprep.subr.mxu0 0.0
    %1081 = vmatpush2.xpose.msra.mxu0 %v614
    %1082 = vmatprep.subr.mxu0 0.0
    %1083 = vmatpush2.xpose.msra.mxu0 %v611
    %1084 = vmatprep.subr.mxu0 0.0
    %1085 = vmatpush2.xpose.msra.mxu0 %v608
    %1086 = vmatprep.subr.mxu0 0.0
    %1087 = vmatpush2.xpose.msra.mxu0 %v605
    %1088 = vmatprep.subr.mxu0 0.0
    %1089 = vmatpush2.xpose.msra.mxu0 %v602
    %1090 = vmatprep.subr.mxu0 0.0
    %1091 = vmatpush2.xpose.msra.mxu0 %v599
    %1092 = vmatprep.subr.mxu0 0.0
    %1093 = vmatpush2.xpose.msra.mxu0 %v596
    %1094 = vmatprep.subr.mxu0 0.0
    %1095 = vmatpush2.xpose.msra.mxu0 %v593
    %1096 = vmatprep.subr.mxu0 0.0
    %1097 = vmatpush2.xpose.msra.mxu0 %v590
    %1098 = vmatprep.subr.mxu0 0.0
    %1099 = vmatpush2.xpose.msra.mxu0 %v587
    %1100 = vmatprep.subr.mxu0 0.0
    %1101 = vmatpush2.xpose.msra.mxu0 %v584
    %1102 = vmatprep.subr.mxu0 0.0
    %1103 = vmatpush2.xpose.msra.mxu0 %v581
    %1104 = vmatprep.subr.mxu0 0.0
    %1105 = vmatpush2.xpose.msra.mxu0 %v578
    %1106 = vmatprep.subr.mxu0 0.0
    %1107 = vmatpush2.xpose.msra.mxu0 %v575
    %1108 = vmatprep.subr.mxu0 0.0
    %1109 = vmatpush2.xpose.msra.mxu0 %v572
    %1110 = vmatprep.mubr.f32.mxu0 0.0
    %1111 = vmatmul.mubr.f32.gmra.mxu0 %v1044
    %v1112 = vpop.f32.mrf.mxu0
    %v1113 = vadd.f32 0.0, %v1112
    %v1114 = vpop.f32.mrf.mxu0
    %v1115 = vadd.f32 0.0, %v1114
    %1116 = vdwg.mxu0
    %v1117 = vsel %vm516, %v1113, %v1115
    %v1118 = vadd.f32 %v1043, %v1117
    %v1119 = vxor.u32 %v1118, 2147483648
    %v1120 = vmul.f32 %v1119, 1.442695
    %v1121 = vpow.pop %v1120
    %v1122 = vadd.f32 %v1121, 1.0
    %v1123 = vrcp.pop %v1122
    %v1124 = vmul.f32 1.0, %v1123
    %v1125 = vtanh.pop %v1118
    %v1126 = vmul.f32 %v1124, %v1030
    %1128 = vrot.lane.b32.xlu0 %v1125, 64
    %v1129 = vpop.permute.xlu0 %1128
    %v1131 = vmul.f32 %v1124, %v1129
    %1133 = vrot.lane.b32.xlu0 %v1131, 32
    %v1134 = vpop.permute.xlu0 %1133
    %v1136 = vadd.f32 %v1126, %v1134
    %v1137 = vtanh.pop %v1136
    %1139 = vrot.lane.b32.xlu0 %v1137, 64
    %v1140 = vpop.permute.xlu0 %1139
    %v1142 = vmul.f32 %v1124, %v1140
    %1144 = vrot.lane.b32.xlu0 %v1142, 32
    %v1145 = vpop.permute.xlu0 %1144
    %s1147 = scalar_lea.vmem [#allocation4], 32
    %1148 = vst.msk [vmem:[%s1147] sm:$0xff] %vm433, %v1145
    %v1149 = vld [vmem:[%s408] sm:$0xff]
    %v1150 = vsel %vm433, %v1145, 0
    %1152 = vmatprep.subr.mxu0 0.0
    %1153 = vmatpush1.xpose.msra.mxu0 %v569
    %1154 = vmatprep.subr.mxu0 0.0
    %1155 = vmatpush1.xpose.msra.mxu0 %v566
    %1156 = vmatprep.subr.mxu0 0.0
    %1157 = vmatpush1.xpose.msra.mxu0 %v563
    %1158 = vmatprep.subr.mxu0 0.0
    %1159 = vmatpush1.xpose.msra.mxu0 %v560
    %1160 = vmatprep.subr.mxu0 0.0
    %1161 = vmatpush1.xpose.msra.mxu0 %v557
    %1162 = vmatprep.subr.mxu0 0.0
    %1163 = vmatpush1.xpose.msra.mxu0 %v554
    %1164 = vmatprep.subr.mxu0 0.0
    %1165 = vmatpush1.xpose.msra.mxu0 %v551
    %1166 = vmatprep.subr.mxu0 0.0
    %1167 = vmatpush1.xpose.msra.mxu0 %v548
    %1168 = vmatprep.subr.mxu0 0.0
    %1169 = vmatpush1.xpose.msra.mxu0 %v545
    %1170 = vmatprep.subr.mxu0 0.0
    %1171 = vmatpush1.xpose.msra.mxu0 %v542
    %1172 = vmatprep.subr.mxu0 0.0
    %1173 = vmatpush1.xpose.msra.mxu0 %v539
    %1174 = vmatprep.subr.mxu0 0.0
    %1175 = vmatpush1.xpose.msra.mxu0 %v536
    %1176 = vmatprep.subr.mxu0 0.0
    %1177 = vmatpush1.xpose.msra.mxu0 %v533
    %1178 = vmatprep.subr.mxu0 0.0
    %1179 = vmatpush1.xpose.msra.mxu0 %v530
    %1180 = vmatprep.subr.mxu0 0.0
    %1181 = vmatpush1.xpose.msra.mxu0 %v527
    %1182 = vmatprep.subr.mxu0 0.0
    %1183 = vmatpush1.xpose.msra.mxu0 %v524
    %1184 = vmatprep.subr.mxu0 0.0
    %1185 = vmatpush2.xpose.msra.mxu0 %v617
    %1186 = vmatprep.subr.mxu0 0.0
    %1187 = vmatpush2.xpose.msra.mxu0 %v614
    %1188 = vmatprep.subr.mxu0 0.0
    %1189 = vmatpush2.xpose.msra.mxu0 %v611
    %1190 = vmatprep.subr.mxu0 0.0
    %1191 = vmatpush2.xpose.msra.mxu0 %v608
    %1192 = vmatprep.subr.mxu0 0.0
    %1193 = vmatpush2.xpose.msra.mxu0 %v605
    %1194 = vmatprep.subr.mxu0 0.0
    %1195 = vmatpush2.xpose.msra.mxu0 %v602
    %1196 = vmatprep.subr.mxu0 0.0
    %1197 = vmatpush2.xpose.msra.mxu0 %v599
    %1198 = vmatprep.subr.mxu0 0.0
    %1199 = vmatpush2.xpose.msra.mxu0 %v596
    %1200 = vmatprep.subr.mxu0 0.0
    %1201 = vmatpush2.xpose.msra.mxu0 %v593
    %1202 = vmatprep.subr.mxu0 0.0
    %1203 = vmatpush2.xpose.msra.mxu0 %v590
    %1204 = vmatprep.subr.mxu0 0.0
    %1205 = vmatpush2.xpose.msra.mxu0 %v587
    %1206 = vmatprep.subr.mxu0 0.0
    %1207 = vmatpush2.xpose.msra.mxu0 %v584
    %1208 = vmatprep.subr.mxu0 0.0
    %1209 = vmatpush2.xpose.msra.mxu0 %v581
    %1210 = vmatprep.subr.mxu0 0.0
    %1211 = vmatpush2.xpose.msra.mxu0 %v578
    %1212 = vmatprep.subr.mxu0 0.0
    %1213 = vmatpush2.xpose.msra.mxu0 %v575
    %1214 = vmatprep.subr.mxu0 0.0
    %1215 = vmatpush2.xpose.msra.mxu0 %v572
    %1216 = vmatprep.mubr.f32.mxu0 0.0
    %1217 = vmatmul.mubr.f32.gmra.mxu0 %v1150
    %v1218 = vpop.f32.mrf.mxu0
    %v1219 = vadd.f32 0.0, %v1218
    %v1220 = vpop.f32.mrf.mxu0
    %v1221 = vadd.f32 0.0, %v1220
    %1222 = vdwg.mxu0
    %v1223 = vsel %vm516, %v1219, %v1221
    %v1224 = vadd.f32 %v1149, %v1223
    %v1225 = vxor.u32 %v1224, 2147483648
    %v1226 = vmul.f32 %v1225, 1.442695
    %v1227 = vpow.pop %v1226
    %v1228 = vadd.f32 %v1227, 1.0
    %v1229 = vrcp.pop %v1228
    %v1230 = vmul.f32 1.0, %v1229
    %v1231 = vtanh.pop %v1224
    %v1232 = vmul.f32 %v1230, %v1136
    %1234 = vrot.lane.b32.xlu0 %v1231, 64
    %v1235 = vpop.permute.xlu0 %1234
    %v1237 = vmul.f32 %v1230, %v1235
    %1239 = vrot.lane.b32.xlu0 %v1237, 32
    %v1240 = vpop.permute.xlu0 %1239
    %v1242 = vadd.f32 %v1232, %v1240
    %v1243 = vtanh.pop %v1242
    %1245 = vrot.lane.b32.xlu0 %v1243, 64
    %v1246 = vpop.permute.xlu0 %1245
    %v1248 = vmul.f32 %v1230, %v1246
    %1250 = vrot.lane.b32.xlu0 %v1248, 32
    %v1251 = vpop.permute.xlu0 %1250
    %s1253 = scalar_lea.vmem [#allocation4], 40
    %1254 = vst.msk [vmem:[%s1253] sm:$0xff] %vm433, %v1251
    %v1255 = vld [vmem:[%s411] sm:$0xff]
    %v1256 = vsel %vm433, %v1251, 0
    %1258 = vmatprep.subr.mxu0 0.0
    %1259 = vmatpush1.xpose.msra.mxu0 %v569
    %1260 = vmatprep.subr.mxu0 0.0
    %1261 = vmatpush1.xpose.msra.mxu0 %v566
    %1262 = vmatprep.subr.mxu0 0.0
    %1263 = vmatpush1.xpose.msra.mxu0 %v563
    %1264 = vmatprep.subr.mxu0 0.0
    %1265 = vmatpush1.xpose.msra.mxu0 %v560
    %1266 = vmatprep.subr.mxu0 0.0
    %1267 = vmatpush1.xpose.msra.mxu0 %v557
    %1268 = vmatprep.subr.mxu0 0.0
    %1269 = vmatpush1.xpose.msra.mxu0 %v554
    %1270 = vmatprep.subr.mxu0 0.0
    %1271 = vmatpush1.xpose.msra.mxu0 %v551
    %1272 = vmatprep.subr.mxu0 0.0
    %1273 = vmatpush1.xpose.msra.mxu0 %v548
    %1274 = vmatprep.subr.mxu0 0.0
    %1275 = vmatpush1.xpose.msra.mxu0 %v545
    %1276 = vmatprep.subr.mxu0 0.0
    %1277 = vmatpush1.xpose.msra.mxu0 %v542
    %1278 = vmatprep.subr.mxu0 0.0
    %1279 = vmatpush1.xpose.msra.mxu0 %v539
    %1280 = vmatprep.subr.mxu0 0.0
    %1281 = vmatpush1.xpose.msra.mxu0 %v536
    %1282 = vmatprep.subr.mxu0 0.0
    %1283 = vmatpush1.xpose.msra.mxu0 %v533
    %1284 = vmatprep.subr.mxu0 0.0
    %1285 = vmatpush1.xpose.msra.mxu0 %v530
    %1286 = vmatprep.subr.mxu0 0.0
    %1287 = vmatpush1.xpose.msra.mxu0 %v527
    %1288 = vmatprep.subr.mxu0 0.0
    %1289 = vmatpush1.xpose.msra.mxu0 %v524
    %1290 = vmatprep.subr.mxu0 0.0
    %1291 = vmatpush2.xpose.msra.mxu0 %v617
    %1292 = vmatprep.subr.mxu0 0.0
    %1293 = vmatpush2.xpose.msra.mxu0 %v614
    %1294 = vmatprep.subr.mxu0 0.0
    %1295 = vmatpush2.xpose.msra.mxu0 %v611
    %1296 = vmatprep.subr.mxu0 0.0
    %1297 = vmatpush2.xpose.msra.mxu0 %v608
    %1298 = vmatprep.subr.mxu0 0.0
    %1299 = vmatpush2.xpose.msra.mxu0 %v605
    %1300 = vmatprep.subr.mxu0 0.0
    %1301 = vmatpush2.xpose.msra.mxu0 %v602
    %1302 = vmatprep.subr.mxu0 0.0
    %1303 = vmatpush2.xpose.msra.mxu0 %v599
    %1304 = vmatprep.subr.mxu0 0.0
    %1305 = vmatpush2.xpose.msra.mxu0 %v596
    %1306 = vmatprep.subr.mxu0 0.0
    %1307 = vmatpush2.xpose.msra.mxu0 %v593
    %1308 = vmatprep.subr.mxu0 0.0
    %1309 = vmatpush2.xpose.msra.mxu0 %v590
    %1310 = vmatprep.subr.mxu0 0.0
    %1311 = vmatpush2.xpose.msra.mxu0 %v587
    %1312 = vmatprep.subr.mxu0 0.0
    %1313 = vmatpush2.xpose.msra.mxu0 %v584
    %1314 = vmatprep.subr.mxu0 0.0
    %1315 = vmatpush2.xpose.msra.mxu0 %v581
    %1316 = vmatprep.subr.mxu0 0.0
    %1317 = vmatpush2.xpose.msra.mxu0 %v578
    %1318 = vmatprep.subr.mxu0 0.0
    %1319 = vmatpush2.xpose.msra.mxu0 %v575
    %1320 = vmatprep.subr.mxu0 0.0
    %1321 = vmatpush2.xpose.msra.mxu0 %v572
    %1322 = vmatprep.mubr.f32.mxu0 0.0
    %1323 = vmatmul.mubr.f32.gmra.mxu0 %v1256
    %v1324 = vpop.f32.mrf.mxu0
    %v1325 = vadd.f32 0.0, %v1324
    %v1326 = vpop.f32.mrf.mxu0
    %v1327 = vadd.f32 0.0, %v1326
    %1328 = vdwg.mxu0
    %v1329 = vsel %vm516, %v1325, %v1327
    %v1330 = vadd.f32 %v1255, %v1329
    %v1331 = vxor.u32 %v1330, 2147483648
    %v1332 = vmul.f32 %v1331, 1.442695
    %v1333 = vpow.pop %v1332
    %v1334 = vadd.f32 %v1333, 1.0
    %v1335 = vrcp.pop %v1334
    %v1336 = vmul.f32 1.0, %v1335
    %v1337 = vtanh.pop %v1330
    %v1338 = vmul.f32 %v1336, %v1242
    %1340 = vrot.lane.b32.xlu0 %v1337, 64
    %v1341 = vpop.permute.xlu0 %1340
    %v1343 = vmul.f32 %v1336, %v1341
    %1345 = vrot.lane.b32.xlu0 %v1343, 32
    %v1346 = vpop.permute.xlu0 %1345
    %v1348 = vadd.f32 %v1338, %v1346
    %v1349 = vtanh.pop %v1348
    %1351 = vrot.lane.b32.xlu0 %v1349, 64
    %v1352 = vpop.permute.xlu0 %1351
    %v1354 = vmul.f32 %v1336, %v1352
    %1356 = vrot.lane.b32.xlu0 %v1354, 32
    %v1357 = vpop.permute.xlu0 %1356
    %s1359 = scalar_lea.vmem [#allocation4], 48
    %1360 = vst.msk [vmem:[%s1359] sm:$0xff] %vm433, %v1357
    %v1361 = vld [vmem:[%s414] sm:$0xff]
    %v1362 = vsel %vm433, %v1357, 0
    %1364 = vmatprep.subr.mxu0 0.0
    %1365 = vmatpush1.xpose.msra.mxu0 %v569
    %1366 = vmatprep.subr.mxu0 0.0
    %1367 = vmatpush1.xpose.msra.mxu0 %v566
    %1368 = vmatprep.subr.mxu0 0.0
    %1369 = vmatpush1.xpose.msra.mxu0 %v563
    %1370 = vmatprep.subr.mxu0 0.0
    %1371 = vmatpush1.xpose.msra.mxu0 %v560
    %1372 = vmatprep.subr.mxu0 0.0
    %1373 = vmatpush1.xpose.msra.mxu0 %v557
    %1374 = vmatprep.subr.mxu0 0.0
    %1375 = vmatpush1.xpose.msra.mxu0 %v554
    %1376 = vmatprep.subr.mxu0 0.0
    %1377 = vmatpush1.xpose.msra.mxu0 %v551
    %1378 = vmatprep.subr.mxu0 0.0
    %1379 = vmatpush1.xpose.msra.mxu0 %v548
    %1380 = vmatprep.subr.mxu0 0.0
    %1381 = vmatpush1.xpose.msra.mxu0 %v545
    %1382 = vmatprep.subr.mxu0 0.0
    %1383 = vmatpush1.xpose.msra.mxu0 %v542
    %1384 = vmatprep.subr.mxu0 0.0
    %1385 = vmatpush1.xpose.msra.mxu0 %v539
    %1386 = vmatprep.subr.mxu0 0.0
    %1387 = vmatpush1.xpose.msra.mxu0 %v536
    %1388 = vmatprep.subr.mxu0 0.0
    %1389 = vmatpush1.xpose.msra.mxu0 %v533
    %1390 = vmatprep.subr.mxu0 0.0
    %1391 = vmatpush1.xpose.msra.mxu0 %v530
    %1392 = vmatprep.subr.mxu0 0.0
    %1393 = vmatpush1.xpose.msra.mxu0 %v527
    %1394 = vmatprep.subr.mxu0 0.0
    %1395 = vmatpush1.xpose.msra.mxu0 %v524
    %1396 = vmatprep.subr.mxu0 0.0
    %1397 = vmatpush2.xpose.msra.mxu0 %v617
    %1398 = vmatprep.subr.mxu0 0.0
    %1399 = vmatpush2.xpose.msra.mxu0 %v614
    %1400 = vmatprep.subr.mxu0 0.0
    %1401 = vmatpush2.xpose.msra.mxu0 %v611
    %1402 = vmatprep.subr.mxu0 0.0
    %1403 = vmatpush2.xpose.msra.mxu0 %v608
    %1404 = vmatprep.subr.mxu0 0.0
    %1405 = vmatpush2.xpose.msra.mxu0 %v605
    %1406 = vmatprep.subr.mxu0 0.0
    %1407 = vmatpush2.xpose.msra.mxu0 %v602
    %1408 = vmatprep.subr.mxu0 0.0
    %1409 = vmatpush2.xpose.msra.mxu0 %v599
    %1410 = vmatprep.subr.mxu0 0.0
    %1411 = vmatpush2.xpose.msra.mxu0 %v596
    %1412 = vmatprep.subr.mxu0 0.0
    %1413 = vmatpush2.xpose.msra.mxu0 %v593
    %1414 = vmatprep.subr.mxu0 0.0
    %1415 = vmatpush2.xpose.msra.mxu0 %v590
    %1416 = vmatprep.subr.mxu0 0.0
    %1417 = vmatpush2.xpose.msra.mxu0 %v587
    %1418 = vmatprep.subr.mxu0 0.0
    %1419 = vmatpush2.xpose.msra.mxu0 %v584
    %1420 = vmatprep.subr.mxu0 0.0
    %1421 = vmatpush2.xpose.msra.mxu0 %v581
    %1422 = vmatprep.subr.mxu0 0.0
    %1423 = vmatpush2.xpose.msra.mxu0 %v578
    %1424 = vmatprep.subr.mxu0 0.0
    %1425 = vmatpush2.xpose.msra.mxu0 %v575
    %1426 = vmatprep.subr.mxu0 0.0
    %1427 = vmatpush2.xpose.msra.mxu0 %v572
    %1428 = vmatprep.mubr.f32.mxu0 0.0
    %1429 = vmatmul.mubr.f32.gmra.mxu0 %v1362
    %v1430 = vpop.f32.mrf.mxu0
    %v1431 = vadd.f32 0.0, %v1430
    %v1432 = vpop.f32.mrf.mxu0
    %v1433 = vadd.f32 0.0, %v1432
    %1434 = vdwg.mxu0
    %v1435 = vsel %vm516, %v1431, %v1433
    %v1436 = vadd.f32 %v1361, %v1435
    %v1437 = vxor.u32 %v1436, 2147483648
    %v1438 = vmul.f32 %v1437, 1.442695
    %v1439 = vpow.pop %v1438
    %v1440 = vadd.f32 %v1439, 1.0
    %v1441 = vrcp.pop %v1440
    %v1442 = vmul.f32 1.0, %v1441
    %v1443 = vtanh.pop %v1436
    %v1444 = vmul.f32 %v1442, %v1348
    %1446 = vrot.lane.b32.xlu0 %v1443, 64
    %v1447 = vpop.permute.xlu0 %1446
    %v1449 = vmul.f32 %v1442, %v1447
    %1451 = vrot.lane.b32.xlu0 %v1449, 32
    %v1452 = vpop.permute.xlu0 %1451
    %v1454 = vadd.f32 %v1444, %v1452
    %v1455 = vtanh.pop %v1454
    %1457 = vrot.lane.b32.xlu0 %v1455, 64
    %v1458 = vpop.permute.xlu0 %1457
    %v1460 = vmul.f32 %v1442, %v1458
    %1462 = vrot.lane.b32.xlu0 %v1460, 32
    %v1463 = vpop.permute.xlu0 %1462
    %s1465 = scalar_lea.vmem [#allocation4], 56
    %1466 = vst.msk [vmem:[%s1465] sm:$0xff] %vm433, %v1463
    %v1467 = vld [vmem:[#allocation4] sm:$0xff]
    %v1468 = vld [vmem:[%s1465] sm:$0xff]
    %v1470 = vrot.slane %v1468, 4
    %v1472 = vadd.f32 %v1467, %v1470
    %vm1473 = vcmask 257024
    %1474 = vst.msk [vmem:[#allocation5] sm:$0xf] %vm1473, %v1472
    %v1475 = vld [vmem:[%s829] sm:$0xff]
    %v1476 = vld [vmem:[%s1359] sm:$0xff]
    %v1478 = vrot.slane %v1476, 4
    %v1480 = vadd.f32 %v1475, %v1478
    %s1481 = scalar_lea.vmem [#allocation5], 4
    %1482 = vst.msk [vmem:[%s1481] sm:$0xf] %vm1473, %v1480
    %v1483 = vld [vmem:[%s935] sm:$0xff]
    %v1484 = vld [vmem:[%s1253] sm:$0xff]
    %v1486 = vrot.slane %v1484, 4
    %v1488 = vadd.f32 %v1483, %v1486
    %s1489 = scalar_lea.vmem [#allocation5], 8
    %1490 = vst.msk [vmem:[%s1489] sm:$0xf] %vm1473, %v1488
    %v1491 = vld [vmem:[%s1041] sm:$0xff]
    %v1492 = vld [vmem:[%s1147] sm:$0xff]
    %v1494 = vrot.slane %v1492, 4
    %v1496 = vadd.f32 %v1491, %v1494
    %s1497 = scalar_lea.vmem [#allocation5], 12
    %1498 = vst.msk [vmem:[%s1497] sm:$0xf] %vm1473, %v1496
    %v1499 = vld [vmem:[%s1147] sm:$0xff]
    %v1500 = vld [vmem:[%s1041] sm:$0xff]
    %v1502 = vrot.slane %v1500, 4
    %v1504 = vadd.f32 %v1499, %v1502
    %s1505 = scalar_lea.vmem [#allocation5], 16
    %1506 = vst.msk [vmem:[%s1505] sm:$0xf] %vm1473, %v1504
    %v1507 = vld [vmem:[%s1253] sm:$0xff]
    %v1508 = vld [vmem:[%s935] sm:$0xff]
    %v1510 = vrot.slane %v1508, 4
    %v1512 = vadd.f32 %v1507, %v1510
    %s1513 = scalar_lea.vmem [#allocation5], 20
    %1514 = vst.msk [vmem:[%s1513] sm:$0xf] %vm1473, %v1512
    %v1515 = vld [vmem:[%s1359] sm:$0xff]
    %v1516 = vld [vmem:[%s829] sm:$0xff]
    %v1518 = vrot.slane %v1516, 4
    %v1520 = vadd.f32 %v1515, %v1518
    %s1521 = scalar_lea.vmem [#allocation5], 24
    %1522 = vst.msk [vmem:[%s1521] sm:$0xf] %vm1473, %v1520
    %v1523 = vld [vmem:[%s1465] sm:$0xff]
    %v1524 = vld [vmem:[#allocation4] sm:$0xff]
    %v1526 = vrot.slane %v1524, 4
    %v1528 = vadd.f32 %v1523, %v1526
    %s1529 = scalar_lea.vmem [#allocation5], 28
    %1530 = vst.msk [vmem:[%s1529] sm:$0xf] %vm1473, %v1528
    %v1531 = vrot.slane %v1460, 4
    %v1533 = vadd.f32 %v1460, %v1531
    %1535 = vrot.lane.b32.xlu0 %v1533, 32
    %v1536 = vpop.permute.xlu0 %1535
    %1538 = vst.msk [vmem:[#allocation7] sm:$0xf] %vm1473, %v1536
    %v1540 = vrot.slane %v1454, 4
    %v1542 = vadd.f32 %v1454, %v1540
    %1544 = vrot.lane.b32.xlu0 %v1542, 96
    %v1545 = vpop.permute.xlu0 %1544
    %1547 = vst.msk [vmem:[#allocation9] sm:$0xf] %vm1473, %v1545
    // Predicated region
    $region46: #{encoder_forward.1} parent=1 // pred_check
      _
    $region47: #{encoder_forward.1} parent=1 // pred_check_branch
      %1549 = sbr.rel (0) target = $region49
    $region48: #{encoder_forward.1} parent=1 // pred_region
      %s1551 = ssub.s32 512, 512
      %1552 = vsyncadd [#allocation6], %s1551
      %s1553 = sshll.u32 [#allocation5], 4
      %s1554 = int_to_ptr.vmem [resolvable:$true] %s1553
      %1559 = dma.vmem_to_hbm [thread:$0]  %s1554, 512, %s11, [#allocation6], 64, 64, 4
    $region49: #{encoder_forward.1} parent=1 // pred_fallthru
      _
    // Predicated region
    $region50: #{encoder_forward.1} parent=1 // pred_check
      _
    $region51: #{encoder_forward.1} parent=1 // pred_check_branch
      %1561 = sbr.rel (0) target = $region53
    $region52: #{encoder_forward.1} parent=1 // pred_region
      %s1563 = ssub.s32 64, 64
      %1564 = vsyncadd [#allocation8], %s1563
      %s1566 = sshll.u32 [#allocation7], 4
      %s1567 = int_to_ptr.vmem [resolvable:$true] %s1566
      %1569 = dma.vmem_to_hbm [thread:$0]  %s1567, 64, %s12, [#allocation8]
    $region53: #{encoder_forward.1} parent=1 // pred_fallthru
      _
    // Predicated region
    $region54: #{encoder_forward.1} parent=1 // pred_check
      _
    $region55: #{encoder_forward.1} parent=1 // pred_check_branch
      %1571 = sbr.rel (0) target = $region57
    $region56: #{encoder_forward.1} parent=1 // pred_region
      %s1573 = ssub.s32 64, 64
      %1574 = vsyncadd [#allocation8], %s1573
      %s1576 = sshll.u32 [#allocation9], 4
      %s1577 = int_to_ptr.vmem [resolvable:$true] %s1576
      %1579 = dma.vmem_to_hbm [thread:$0]  %s1577, 64, %s13, [#allocation8]
    $region57: #{encoder_forward.1} parent=1 // pred_fallthru
      _
    // Predicated region
    $region58: #{encoder_forward.1} parent=1 // pred_check
      _
    $region59: #{encoder_forward.1} parent=1 // pred_check_branch
      %1581 = sbr.rel (0) target = $region61
    $region60: #{encoder_forward.1} parent=1 // pred_region
      %1582 = dma.done [#allocation6], 512
    $region61: #{encoder_forward.1} parent=1 // pred_fallthru
      _
    // Predicated region
    $region62: #{encoder_forward.1} parent=1 // pred_check
      _
    $region63: #{encoder_forward.1} parent=1 // pred_check_branch
      %1584 = sbr.rel (0) target = $region65
    $region64: #{encoder_forward.1} parent=1 // pred_region
      %1585 = dma.done [#allocation8], 64
    $region65: #{encoder_forward.1} parent=1 // pred_fallthru
      _
    // Predicated region
    $region66: #{encoder_forward.1} parent=1 // pred_check
      _
    $region67: #{encoder_forward.1} parent=1 // pred_check_branch
      %1587 = sbr.rel (0) target = $region69
    $region68: #{encoder_forward.1} parent=1 // pred_region
      %1588 = dma.done [#allocation8], 64
    $region69: #{encoder_forward.1} parent=1 // pred_fallthru
      _
    %1589 = vsyncpa [#allocation6], 1
    %1590 = vsyncpa [#allocation8], 1

</llo_original>
